<compile_context>
chip_gen: v6e
topology: v6e:2x2x1
jax: 0.10.0
libtpu: 0.0.40
codegen_flags: <defaults>
</compile_context>

<pallas_src>
import functools

import jax
import jax.numpy as jnp
from jax.experimental import pallas as pl
from jax.experimental.pallas import tpu as pltpu

EPS = 1e-5
NEG_SLOPE = 0.1
_MB = 1024 * 1024


def _leaky(x):
    return jnp.where(x > 0, x, NEG_SLOPE * x)


def _pick_tile(total, cap):
    """Largest t <= cap dividing `total` with t % 8 == 0 (or t == total)."""
    cap = max(1, min(cap, total))
    for t in range(cap, 0, -1):
        if total % t == 0 and (t % 8 == 0 or t == total):
            return t
    return total


def _pick_divisor(total, cap):
    cap = max(1, min(cap, total))
    for t in range(cap, 0, -1):
        if total % t == 0:
            return t
    return 1


def _vmem_limit(step_bytes):
    # Explicit scoped-VMEM budget derived from tile sizes; capped at 64 MiB so
    # the same configuration stays legal on v7x (64 MiB physical VMEM).
    return int(min(64 * _MB, max(32 * _MB, 4 * step_bytes)))


# --------------------------------------------------------------------------
# Pass 1: 1x1 conv (plain MXU matmul, bf16 operands / f32 accum)
#         + per-tile BN1 partial statistics (sum, sumsq).
# --------------------------------------------------------------------------
def _conv1_stats_kernel(x_ref, w1_ref, h_ref, st_ref):
    # x_ref: (TM, Cin) f32   w1_ref: (Cin, Chid) bf16
    # h_ref: (TM, Chid) bf16 st_ref: (1, 2, Chid) f32
    h = jnp.dot(x_ref[...].astype(jnp.bfloat16), w1_ref[...],
                preferred_element_type=jnp.float32)
    h_ref[...] = h.astype(h_ref.dtype)
    s = jnp.sum(h, axis=0)
    ss = jnp.sum(h * h, axis=0)          # fused sum / sum-of-squares pass
    st_ref[...] = jnp.concatenate([s[None, :], ss[None, :]], axis=0)[None]


# --------------------------------------------------------------------------
# Pass 2: apply BN1+leaky, 3x3 conv via im2col + single MXU matmul,
#         + per-slab BN2 partial statistics.  Grid = (N, H-slabs); the one-row
#         top/bottom halos arrive as separate 1-row blocks and are zero-masked
#         at image edges (zero padding of the *activation*).
# --------------------------------------------------------------------------
def _conv2_stats_kernel(hm_ref, ht_ref, hb_ref, s1_ref, t1_ref, w2_ref,
                        z_ref, st_ref):
    TH, W, Chid = hm_ref.shape[1], hm_ref.shape[2], hm_ref.shape[3]
    Cin = z_ref.shape[3]
    s_idx = pl.program_id(1)
    n_slab = pl.num_programs(1)

    sc = s1_ref[...].reshape(1, 1, Chid)
    sh = t1_ref[...].reshape(1, 1, Chid)

    def bn_act(h):
        y = h.astype(jnp.float32) * sc + sh
        return _leaky(y)

    y_mid = bn_act(hm_ref[0]).astype(jnp.bfloat16)                    # (TH, W, Chid)
    y_top = jnp.where(s_idx > 0, bn_act(ht_ref[0]), 0.0).astype(jnp.bfloat16)
    y_bot = jnp.where(s_idx < n_slab - 1, bn_act(hb_ref[0]), 0.0).astype(jnp.bfloat16)

    # (TH+2, W+2, Chid) zero-padded activation slab (halo only, no full zero fill).
    y = jnp.concatenate([y_top, y_mid, y_bot], axis=0)
    zcol = jnp.zeros((TH + 2, 1, Chid), jnp.bfloat16)
    ypad = jnp.concatenate([zcol, y, zcol], axis=1)

    # im2col: one (TH*W, 9*Chid) patch -> single MXU matmul, K = 9*Chid.
    cols = []
    for dy in range(3):
        for dx in range(3):
            cols.append(ypad[dy:dy + TH, dx:dx + W, :].reshape(TH * W, Chid))
    patch = jnp.concatenate(cols, axis=-1)                            # bf16

    z = jnp.dot(patch, w2_ref[...], preferred_element_type=jnp.float32)

    z_ref[...] = z.reshape(1, TH, W, Cin).astype(z_ref.dtype)
    s = jnp.sum(z, axis=0)
    ss = jnp.sum(z * z, axis=0)
    st_ref[...] = jnp.concatenate([s[None, :], ss[None, :]],
                                  axis=0).reshape(1, 1, 2, Cin)


# --------------------------------------------------------------------------
# Pass 3: BN2 apply + leaky + residual add.  Lane-dense layout: last dim = W*C.
# --------------------------------------------------------------------------
def _bn2_residual_kernel(z_ref, x_ref, sc_ref, sh_ref, o_ref):
    y = z_ref[...].astype(jnp.float32) * sc_ref[...] + sh_ref[...]
    o_ref[...] = _leaky(y) + x_ref[...]


@functools.partial(jax.jit, static_argnames=("rows_per_slab",))
def darknet_block(x_nchw, wc1, g1, b1, wc2, g2, b2, *, rows_per_slab=None):
    """NCHW in/out, PyTorch-shaped weights.

    wc1: (Chid, Cin, 1, 1)  conv1.weight     g1, b1: (Chid,) bn1 gamma/beta
    wc2: (Cin, Chid, 3, 3)  conv2.weight     g2, b2: (Cin,)  bn2 gamma/beta
    """
    N, Cin, H, W = x_nchw.shape
    Chid = wc1.shape[0]
    M = N * H * W

    x_nhwc = jnp.transpose(x_nchw, (0, 2, 3, 1)).astype(jnp.float32)
    x2d = x_nhwc.reshape(M, Cin)

    w1 = jnp.transpose(wc1[:, :, 0, 0], (1, 0)).astype(jnp.bfloat16)      # (Cin, Chid)
    # Row index of w2mat = (3*dy + dx)*Chid + c  -> matches im2col column order.
    w2 = jnp.transpose(wc2, (2, 3, 1, 0)).reshape(9 * Chid, Cin).astype(jnp.bfloat16)

    # ------------------ pass 1: conv1 + BN1 partial stats -------------------
    TM = _pick_tile(M, 256)
    G1 = M // TM
    step1 = TM * (Cin * 4 + Chid * 2) * 2 + TM * Chid * 4
    h_flat, st1 = pl.pallas_call(
        _conv1_stats_kernel,
        grid=(G1,),
        in_specs=[pl.BlockSpec((TM, Cin), lambda i: (i, 0)),
                  pl.BlockSpec((Cin, Chid), lambda i: (0, 0))],
        out_specs=[pl.BlockSpec((TM, Chid), lambda i: (i, 0)),
                   pl.BlockSpec((1, 2, Chid), lambda i: (i, 0, 0))],
        out_shape=[jax.ShapeDtypeStruct((M, Chid), jnp.bfloat16),
                   jax.ShapeDtypeStruct((G1, 2, Chid), jnp.float32)],
        compiler_params=pltpu.CompilerParams(
            dimension_semantics=("parallel",),
            vmem_limit_bytes=_vmem_limit(step1)),
        cost_estimate=pl.CostEstimate(
            flops=2 * M * Cin * Chid + 4 * M * Chid,
            transcendentals=0,
            bytes_accessed=M * Cin * 4 + M * Chid * 2 + G1 * 2 * Chid * 4),
    )(x2d, w1)

    # Fold BN1 (training-mode batch stats, biased variance) into scale/shift.
    sum1 = jnp.sum(st1[:, 0, :], axis=0)
    sumsq1 = jnp.sum(st1[:, 1, :], axis=0)
    mu1 = sum1 / M
    var1 = jnp.maximum(sumsq1 / M - mu1 * mu1, 0.0)
    scale1 = (g1.astype(jnp.float32) * jax.lax.rsqrt(var1 + EPS)).reshape(1, Chid)
    shift1 = b1.astype(jnp.float32).reshape(1, Chid) - mu1.reshape(1, Chid) * scale1

    # ------------- pass 2: BN1 apply + conv2 (3x3) + BN2 partial stats ------
    h = h_flat.reshape(N, H, W, Chid)

    per_row_bytes = W * (9 * Chid * 2       # im2col patch (bf16)
                         + Cin * 2 * 2      # z slab (bf16) double-buffered
                         + Chid * 2 * 3     # h slab + halo rows (bf16)
                         + Chid * 4 * 4)    # f32 activation temporaries
    if rows_per_slab is None:
        rows_per_slab = max(1, (20 * _MB) // max(per_row_bytes, 1))
    TH = _pick_divisor(H, rows_per_slab)
    S = H // TH
    step2 = TH * per_row_bytes

    z, st2 = pl.pallas_call(
        _conv2_stats_kernel,
        grid=(N, S),
        in_specs=[
            pl.BlockSpec((1, TH, W, Chid), lambda n, s: (n, s, 0, 0)),
            pl.BlockSpec((1, 1, W, Chid),
                         lambda n, s: (n, jnp.maximum(s * TH - 1, 0), 0, 0)),
            pl.BlockSpec((1, 1, W, Chid),
                         lambda n, s: (n, jnp.minimum((s + 1) * TH, H - 1), 0, 0)),
            pl.BlockSpec((1, Chid), lambda n, s: (0, 0)),
            pl.BlockSpec((1, Chid), lambda n, s: (0, 0)),
            pl.BlockSpec((9 * Chid, Cin), lambda n, s: (0, 0)),
        ],
        out_specs=[
            pl.BlockSpec((1, TH, W, Cin), lambda n, s: (n, s, 0, 0)),
            pl.BlockSpec((1, 1, 2, Cin), lambda n, s: (n, s, 0, 0)),
        ],
        out_shape=[jax.ShapeDtypeStruct((N, H, W, Cin), jnp.bfloat16),
                   jax.ShapeDtypeStruct((N, S, 2, Cin), jnp.float32)],
        compiler_params=pltpu.CompilerParams(
            dimension_semantics=("parallel", "parallel"),
            vmem_limit_bytes=_vmem_limit(step2)),
        cost_estimate=pl.CostEstimate(
            flops=2 * M * 9 * Chid * Cin + 8 * M * Chid,
            transcendentals=0,
            bytes_accessed=M * Chid * 2 + M * Cin * 2 + N * S * 2 * Cin * 4),
    )(h, h, h, scale1, shift1, w2)

    sum2 = jnp.sum(st2[:, :, 0, :], axis=(0, 1))
    sumsq2 = jnp.sum(st2[:, :, 1, :], axis=(0, 1))
    mu2 = sum2 / M
    var2 = jnp.maximum(sumsq2 / M - mu2 * mu2, 0.0)
    scale2 = (g2.astype(jnp.float32) * jax.lax.rsqrt(var2 + EPS)).reshape(1, Cin)
    shift2 = b2.astype(jnp.float32).reshape(1, Cin) - mu2.reshape(1, Cin) * scale2

    # ------------- pass 3: BN2 apply + leaky + residual (lane-dense) --------
    R = N * H
    z_rows = z.reshape(R, W * Cin)          # last dim = W*Cin -> dense lanes
    x_rows = x_nhwc.reshape(R, W * Cin)
    scale2_l = jnp.tile(scale2, (1, W))     # lane l -> channel l % Cin
    shift2_l = jnp.tile(shift2, (1, W))

    TR = _pick_tile(R, 128)
    G3 = R // TR
    step3 = TR * W * Cin * (2 + 4 + 4) * 2
    out_rows = pl.pallas_call(
        _bn2_residual_kernel,
        grid=(G3,),
        in_specs=[pl.BlockSpec((TR, W * Cin), lambda i: (i, 0)),
                  pl.BlockSpec((TR, W * Cin), lambda i: (i, 0)),
                  pl.BlockSpec((1, W * Cin), lambda i: (0, 0)),
                  pl.BlockSpec((1, W * Cin), lambda i: (0, 0))],
        out_specs=pl.BlockSpec((TR, W * Cin), lambda i: (i, 0)),
        out_shape=jax.ShapeDtypeStruct((R, W * Cin), jnp.float32),
        compiler_params=pltpu.CompilerParams(
            dimension_semantics=("parallel",),
            vmem_limit_bytes=_vmem_limit(step3)),
        cost_estimate=pl.CostEstimate(
            flops=4 * M * Cin,
            transcendentals=0,
            bytes_accessed=M * Cin * (2 + 4 + 4)),
    )(z_rows, x_rows, scale2_l, shift2_l)

    out_nhwc = out_rows.reshape(N, H, W, Cin)
    return jnp.transpose(out_nhwc, (0, 3, 1, 2))


def _reference(x_nchw, wc1, g1, b1, wc2, g2, b2):
    """Pure-JAX f32 reference: Conv2d + BatchNorm2d(train) + leaky_relu."""
    def convbn(x, w, g, b, pad):
        y = jax.lax.conv_general_dilated(
            x, w, window_strides=(1, 1),
            padding=[(pad, pad), (pad, pad)],
            dimension_numbers=("NCHW", "OIHW", "NCHW"))
        mu = jnp.mean(y, axis=(0, 2, 3), keepdims=True)
        var = jnp.mean((y - mu) ** 2, axis=(0, 2, 3), keepdims=True)
        yn = (y - mu) / jnp.sqrt(var + EPS) * g.reshape(1, -1, 1, 1) + b.reshape(1, -1, 1, 1)
        return jnp.where(yn > 0, yn, NEG_SLOPE * yn)

    h = convbn(x_nchw, wc1, g1, b1, 0)
    o = convbn(h, wc2, g2, b2, 1)
    return o + x_nchw


if __name__ == "__main__":
    key = jax.random.PRNGKey(0)
    N, Cin, H, W = 2, 16, 16, 16            # DarknetBlock: ch_hid = ch_in // 2
    Chid = Cin // 2
    ks = jax.random.split(key, 7)

    x = jax.random.normal(ks[0], (N, Cin, H, W), jnp.float32)
    wc1 = 0.2 * jax.random.normal(ks[1], (Chid, Cin, 1, 1), jnp.float32)
    wc2 = 0.1 * jax.random.normal(ks[2], (Cin, Chid, 3, 3), jnp.float32)
    g1 = 1.0 + 0.1 * jax.random.normal(ks[3], (Chid,), jnp.float32)
    b1 = 0.1 * jax.random.normal(ks[4], (Chid,), jnp.float32)
    g2 = 1.0 + 0.1 * jax.random.normal(ks[5], (Cin,), jnp.float32)
    b2 = 0.1 * jax.random.normal(ks[6], (Cin,), jnp.float32)

    # rows_per_slab=8 -> 2 row-slabs per image: exercises the halo-row path.
    out = darknet_block(x, wc1, g1, b1, wc2, g2, b2, rows_per_slab=8)
    out = jax.block_until_ready(out)

    ref = _reference(x, wc1, g1, b1, wc2, g2, b2)
    assert out.shape == x.shape
    max_err = float(jnp.max(jnp.abs(out - ref)))
    # bf16 MXU operands vs f32 reference -> relaxed tolerance.
    assert jnp.allclose(out, ref, atol=5e-2, rtol=5e-2), f"max_err={max_err}"
    print("KERNEL_OK")
</pallas_src>

<mosaic_0001>
module attributes {stable_mosaic.version = 11 : i64} {
  func.func @_conv2_stats_kernel(%arg0: i32, %arg1: i32, %arg2: memref<1x8x16x8xbf16, #tpu.memory_space<vmem>>, %arg3: memref<1x1x16x8xbf16, #tpu.memory_space<vmem>>, %arg4: memref<1x1x16x8xbf16, #tpu.memory_space<vmem>>, %arg5: memref<1x8xf32, #tpu.memory_space<vmem>>, %arg6: memref<1x8xf32, #tpu.memory_space<vmem>>, %arg7: memref<72x16xbf16, #tpu.memory_space<vmem>>, %arg8: memref<1x8x16x16xbf16, #tpu.memory_space<vmem>>, %arg9: memref<1x1x2x16xf32, #tpu.memory_space<vmem>>) attributes {dimension_semantics = [#tpu.dimension_semantics<parallel>, #tpu.dimension_semantics<parallel>], iteration_bounds = array<i64: 2, 2>, scalar_prefetch = 0 : i64, scratch_operands = 0 : i64, tpu.core_type = #tpu.core_type<tc>, window_params = [{transform_indices = @transform_0, window_bounds = array<i64: 1, 8, 16, 8>}, {transform_indices = @transform_1, window_bounds = array<i64: 1, 1, 16, 8>}, {transform_indices = @transform_2, window_bounds = array<i64: 1, 1, 16, 8>}, {pipeline_mode = #tpu.pipeline_mode<synchronous>, transform_indices = @transform_3, window_bounds = array<i64: 1, 8>}, {pipeline_mode = #tpu.pipeline_mode<synchronous>, transform_indices = @transform_4, window_bounds = array<i64: 1, 8>}, {pipeline_mode = #tpu.pipeline_mode<synchronous>, transform_indices = @transform_5, window_bounds = array<i64: 72, 16>}, {transform_indices = @transform_6, window_bounds = array<i64: 1, 8, 16, 16>}, {transform_indices = @transform_7, window_bounds = array<i64: 1, 1, 2, 16>}]} {
    %c0 = arith.constant 0 : index
    %c0_0 = arith.constant 0 : index
    %0 = vector.load %arg5[%c0, %c0_0] : memref<1x8xf32, #tpu.memory_space<vmem>>, vector<1x8xf32>
    %1 = vector.shape_cast %0 : vector<1x8xf32> to vector<1x1x8xf32>
    %c0_1 = arith.constant 0 : index
    %c0_2 = arith.constant 0 : index
    %2 = vector.load %arg6[%c0_1, %c0_2] : memref<1x8xf32, #tpu.memory_space<vmem>>, vector<1x8xf32>
    %3 = vector.shape_cast %2 : vector<1x8xf32> to vector<1x1x8xf32>
    %c0_3 = arith.constant 0 : index
    %c0_4 = arith.constant 0 : index
    %c0_5 = arith.constant 0 : index
    %c0_6 = arith.constant 0 : index
    %4 = vector.load %arg2[%c0_3, %c0_4, %c0_5, %c0_6] : memref<1x8x16x8xbf16, #tpu.memory_space<vmem>>, vector<1x8x16x8xbf16>
    %5 = vector.shape_cast %4 : vector<1x8x16x8xbf16> to vector<8x16x8xbf16>
    %6 = arith.extf %5 : vector<8x16x8xbf16> to vector<8x16x8xf32>
    %7 = vector.broadcast %1 : vector<1x1x8xf32> to vector<8x16x8xf32>
    %8 = arith.mulf %6, %7 : vector<8x16x8xf32>
    %9 = vector.broadcast %3 : vector<1x1x8xf32> to vector<8x16x8xf32>
    %10 = arith.addf %8, %9 : vector<8x16x8xf32>
    %cst = arith.constant 0.000000e+00 : f32
    %11 = vector.broadcast %cst : f32 to vector<8x16x8xf32>
    %12 = arith.cmpf ogt, %10, %11 : vector<8x16x8xf32>
    %cst_7 = arith.constant 1.000000e-01 : f32
    %13 = vector.broadcast %cst_7 : f32 to vector<8x16x8xf32>
    %14 = arith.mulf %13, %10 : vector<8x16x8xf32>
    %15 = arith.select %12, %10, %14 : vector<8x16x8xi1>, vector<8x16x8xf32>
    %16 = arith.truncf %15 : vector<8x16x8xf32> to vector<8x16x8xbf16>
    %c0_i32 = arith.constant 0 : i32
    %17 = arith.cmpi sgt, %arg1, %c0_i32 : i32
    %c0_8 = arith.constant 0 : index
    %c0_9 = arith.constant 0 : index
    %c0_10 = arith.constant 0 : index
    %c0_11 = arith.constant 0 : index
    %18 = vector.load %arg3[%c0_8, %c0_9, %c0_10, %c0_11] : memref<1x1x16x8xbf16, #tpu.memory_space<vmem>>, vector<1x1x16x8xbf16>
    %19 = vector.shape_cast %18 : vector<1x1x16x8xbf16> to vector<1x16x8xbf16>
    %20 = arith.extf %19 : vector<1x16x8xbf16> to vector<1x16x8xf32>
    %21 = vector.broadcast %1 : vector<1x1x8xf32> to vector<1x16x8xf32>
    %22 = arith.mulf %20, %21 : vector<1x16x8xf32>
    %23 = vector.broadcast %3 : vector<1x1x8xf32> to vector<1x16x8xf32>
    %24 = arith.addf %22, %23 : vector<1x16x8xf32>
    %cst_12 = arith.constant 0.000000e+00 : f32
    %25 = vector.broadcast %cst_12 : f32 to vector<1x16x8xf32>
    %26 = arith.cmpf ogt, %24, %25 : vector<1x16x8xf32>
    %cst_13 = arith.constant 1.000000e-01 : f32
    %27 = vector.broadcast %cst_13 : f32 to vector<1x16x8xf32>
    %28 = arith.mulf %27, %24 : vector<1x16x8xf32>
    %29 = arith.select %26, %24, %28 : vector<1x16x8xi1>, vector<1x16x8xf32>
    %cst_14 = arith.constant 0.000000e+00 : f32
    %30 = vector.broadcast %cst_14 : f32 to vector<1x16x8xf32>
    %31 = arith.select %17, %29, %30 : vector<1x16x8xf32>
    %32 = arith.truncf %31 : vector<1x16x8xf32> to vector<1x16x8xbf16>
    %c1_i32 = arith.constant 1 : i32
    %33 = arith.cmpi slt, %arg1, %c1_i32 : i32
    %c0_15 = arith.constant 0 : index
    %c0_16 = arith.constant 0 : index
    %c0_17 = arith.constant 0 : index
    %c0_18 = arith.constant 0 : index
    %34 = vector.load %arg4[%c0_15, %c0_16, %c0_17, %c0_18] : memref<1x1x16x8xbf16, #tpu.memory_space<vmem>>, vector<1x1x16x8xbf16>
    %35 = vector.shape_cast %34 : vector<1x1x16x8xbf16> to vector<1x16x8xbf16>
    %36 = arith.extf %35 : vector<1x16x8xbf16> to vector<1x16x8xf32>
    %37 = vector.broadcast %1 : vector<1x1x8xf32> to vector<1x16x8xf32>
    %38 = arith.mulf %36, %37 : vector<1x16x8xf32>
    %39 = vector.broadcast %3 : vector<1x1x8xf32> to vector<1x16x8xf32>
    %40 = arith.addf %38, %39 : vector<1x16x8xf32>
    %cst_19 = arith.constant 0.000000e+00 : f32
    %41 = vector.broadcast %cst_19 : f32 to vector<1x16x8xf32>
    %42 = arith.cmpf ogt, %40, %41 : vector<1x16x8xf32>
    %cst_20 = arith.constant 1.000000e-01 : f32
    %43 = vector.broadcast %cst_20 : f32 to vector<1x16x8xf32>
    %44 = arith.mulf %43, %40 : vector<1x16x8xf32>
    %45 = arith.select %42, %40, %44 : vector<1x16x8xi1>, vector<1x16x8xf32>
    %cst_21 = arith.constant 0.000000e+00 : f32
    %46 = vector.broadcast %cst_21 : f32 to vector<1x16x8xf32>
    %47 = arith.select %33, %45, %46 : vector<1x16x8xf32>
    %48 = arith.truncf %47 : vector<1x16x8xf32> to vector<1x16x8xbf16>
    %49 = tpu.concatenate %32, %16, %48 in 0 : vector<1x16x8xbf16>, vector<8x16x8xbf16>, vector<1x16x8xbf16> -> vector<10x16x8xbf16>
    %cst_22 = arith.constant 0.000000e+00 : bf16
    %50 = vector.broadcast %cst_22 : bf16 to vector<10x1x8xbf16>
    %51 = tpu.concatenate %50, %49, %50 in 1 : vector<10x1x8xbf16>, vector<10x16x8xbf16>, vector<10x1x8xbf16> -> vector<10x18x8xbf16>
    %52 = vector.extract_strided_slice %51 {offsets = [0, 0, 0], sizes = [8, 16, 8], strides = [1, 1, 1]} : vector<10x18x8xbf16> to vector<8x16x8xbf16>
    %53 = vector.shape_cast %52 : vector<8x16x8xbf16> to vector<128x8xbf16>
    %54 = vector.extract_strided_slice %51 {offsets = [0, 1, 0], sizes = [8, 16, 8], strides = [1, 1, 1]} : vector<10x18x8xbf16> to vector<8x16x8xbf16>
    %55 = vector.shape_cast %54 : vector<8x16x8xbf16> to vector<128x8xbf16>
    %56 = vector.extract_strided_slice %51 {offsets = [0, 2, 0], sizes = [8, 16, 8], strides = [1, 1, 1]} : vector<10x18x8xbf16> to vector<8x16x8xbf16>
    %57 = vector.shape_cast %56 : vector<8x16x8xbf16> to vector<128x8xbf16>
    %58 = vector.extract_strided_slice %51 {offsets = [1, 0, 0], sizes = [8, 16, 8], strides = [1, 1, 1]} : vector<10x18x8xbf16> to vector<8x16x8xbf16>
    %59 = vector.shape_cast %58 : vector<8x16x8xbf16> to vector<128x8xbf16>
    %60 = vector.extract_strided_slice %51 {offsets = [1, 1, 0], sizes = [8, 16, 8], strides = [1, 1, 1]} : vector<10x18x8xbf16> to vector<8x16x8xbf16>
    %61 = vector.shape_cast %60 : vector<8x16x8xbf16> to vector<128x8xbf16>
    %62 = vector.extract_strided_slice %51 {offsets = [1, 2, 0], sizes = [8, 16, 8], strides = [1, 1, 1]} : vector<10x18x8xbf16> to vector<8x16x8xbf16>
    %63 = vector.shape_cast %62 : vector<8x16x8xbf16> to vector<128x8xbf16>
    %64 = vector.extract_strided_slice %51 {offsets = [2, 0, 0], sizes = [8, 16, 8], strides = [1, 1, 1]} : vector<10x18x8xbf16> to vector<8x16x8xbf16>
    %65 = vector.shape_cast %64 : vector<8x16x8xbf16> to vector<128x8xbf16>
    %66 = vector.extract_strided_slice %51 {offsets = [2, 1, 0], sizes = [8, 16, 8], strides = [1, 1, 1]} : vector<10x18x8xbf16> to vector<8x16x8xbf16>
    %67 = vector.shape_cast %66 : vector<8x16x8xbf16> to vector<128x8xbf16>
    %68 = vector.extract_strided_slice %51 {offsets = [2, 2, 0], sizes = [8, 16, 8], strides = [1, 1, 1]} : vector<10x18x8xbf16> to vector<8x16x8xbf16>
    %69 = vector.shape_cast %68 : vector<8x16x8xbf16> to vector<128x8xbf16>
    %70 = tpu.concatenate %53, %55, %57, %59, %61, %63, %65, %67, %69 in 1 : vector<128x8xbf16>, vector<128x8xbf16>, vector<128x8xbf16>, vector<128x8xbf16>, vector<128x8xbf16>, vector<128x8xbf16>, vector<128x8xbf16>, vector<128x8xbf16>, vector<128x8xbf16> -> vector<128x72xbf16>
    %c0_23 = arith.constant 0 : index
    %c0_24 = arith.constant 0 : index
    %71 = vector.load %arg7[%c0_23, %c0_24] : memref<72x16xbf16, #tpu.memory_space<vmem>>, vector<72x16xbf16>
    %cst_25 = arith.constant dense<0.000000e+00> : vector<128x16xf32>
    %72 = tpu.matmul %70, %71, %cst_25 {dimension_numbers = #tpu.dot_dimension_numbers<[1], [0], [0], [1], [0, 0, 1, 1], [], []>} : vector<128x72xbf16>, vector<72x16xbf16>, vector<128x16xf32> -> vector<128x16xf32>
    %73 = vector.shape_cast %72 : vector<128x16xf32> to vector<1x8x16x16xf32>
    %74 = arith.truncf %73 : vector<1x8x16x16xf32> to vector<1x8x16x16xbf16>
    %c0_26 = arith.constant 0 : index
    %c0_27 = arith.constant 0 : index
    %c0_28 = arith.constant 0 : index
    %c0_29 = arith.constant 0 : index
    %75 = vector.load %arg8[%c0_26, %c0_27, %c0_28, %c0_29] : memref<1x8x16x16xbf16, #tpu.memory_space<vmem>>, vector<1x8x16x16xbf16>
    tpu.vector_store %arg8[%c0_26, %c0_27, %c0_28, %c0_29], %74 {strides = array<i32>} : memref<1x8x16x16xbf16, #tpu.memory_space<vmem>>, vector<1x8x16x16xbf16>,
    %cst_30 = arith.constant dense<0.000000e+00> : vector<16xf32>
    %76 = vector.multi_reduction <add>, %72, %cst_30 [0] : vector<128x16xf32> to vector<16xf32>
    %77 = arith.mulf %72, %72 : vector<128x16xf32>
    %cst_31 = arith.constant dense<0.000000e+00> : vector<16xf32>
    %78 = vector.multi_reduction <add>, %77, %cst_31 [0] : vector<128x16xf32> to vector<16xf32>
    %79 = vector.shape_cast %76 : vector<16xf32> to vector<1x16xf32>
    %80 = vector.shape_cast %78 : vector<16xf32> to vector<1x16xf32>
    %81 = tpu.concatenate %79, %80 in 0 : vector<1x16xf32>, vector<1x16xf32> -> vector<2x16xf32>
    %82 = vector.shape_cast %81 : vector<2x16xf32> to vector<1x1x2x16xf32>
    %c0_32 = arith.constant 0 : index
    %c0_33 = arith.constant 0 : index
    %c0_34 = arith.constant 0 : index
    %c0_35 = arith.constant 0 : index
    %83 = vector.load %arg9[%c0_32, %c0_33, %c0_34, %c0_35] : memref<1x1x2x16xf32, #tpu.memory_space<vmem>>, vector<1x1x2x16xf32>
    tpu.vector_store %arg9[%c0_32, %c0_33, %c0_34, %c0_35], %82 {strides = array<i32>} : memref<1x1x2x16xf32, #tpu.memory_space<vmem>>, vector<1x1x2x16xf32>,
    return
  }
  func.func @transform_0(%arg0: i32, %arg1: i32) -> (i32, i32, i32, i32) {
    %c0_i32 = arith.constant 0 : i32
    %c0_i32_0 = arith.constant 0 : i32
    %c0_i32_1 = arith.constant 0 : i32
    return %arg0, %arg1, %c0_i32, %c0_i32_0 : i32, i32, i32, i32
  }
  func.func @transform_1(%arg0: i32, %arg1: i32) -> (i32, i32, i32, i32) {
    %c8_i32 = arith.constant 8 : i32
    %0 = arith.muli %arg1, %c8_i32 : i32
    %c1_i32 = arith.constant 1 : i32
    %1 = arith.subi %0, %c1_i32 : i32
    %c0_i32 = arith.constant 0 : i32
    %2 = arith.maxsi %1, %c0_i32 : i32
    %c0_i32_0 = arith.constant 0 : i32
    %c0_i32_1 = arith.constant 0 : i32
    %c0_i32_2 = arith.constant 0 : i32
    return %arg0, %2, %c0_i32_0, %c0_i32_1 : i32, i32, i32, i32
  }
  func.func @transform_2(%arg0: i32, %arg1: i32) -> (i32, i32, i32, i32) {
    %c1_i32 = arith.constant 1 : i32
    %0 = arith.addi %arg1, %c1_i32 : i32
    %c8_i32 = arith.constant 8 : i32
    %1 = arith.muli %0, %c8_i32 : i32
    %c15_i32 = arith.constant 15 : i32
    %2 = arith.minsi %1, %c15_i32 : i32
    %c0_i32 = arith.constant 0 : i32
    %c0_i32_0 = arith.constant 0 : i32
    %c0_i32_1 = arith.constant 0 : i32
    return %arg0, %2, %c0_i32, %c0_i32_0 : i32, i32, i32, i32
  }
  func.func @transform_3(%arg0: i32, %arg1: i32) -> (i32, i32) {
    %c0_i32 = arith.constant 0 : i32
    %c0_i32_0 = arith.constant 0 : i32
    %c0_i32_1 = arith.constant 0 : i32
    return %c0_i32, %c0_i32_0 : i32, i32
  }
  func.func @transform_4(%arg0: i32, %arg1: i32) -> (i32, i32) {
    %c0_i32 = arith.constant 0 : i32
    %c0_i32_0 = arith.constant 0 : i32
    %c0_i32_1 = arith.constant 0 : i32
    return %c0_i32, %c0_i32_0 : i32, i32
  }
  func.func @transform_5(%arg0: i32, %arg1: i32) -> (i32, i32) {
    %c0_i32 = arith.constant 0 : i32
    %c0_i32_0 = arith.constant 0 : i32
    %c0_i32_1 = arith.constant 0 : i32
    return %c0_i32, %c0_i32_0 : i32, i32
  }
  func.func @transform_6(%arg0: i32, %arg1: i32) -> (i32, i32, i32, i32) {
    %c0_i32 = arith.constant 0 : i32
    %c0_i32_0 = arith.constant 0 : i32
    %c0_i32_1 = arith.constant 0 : i32
    return %arg0, %arg1, %c0_i32, %c0_i32_0 : i32, i32, i32, i32
  }
  func.func @transform_7(%arg0: i32, %arg1: i32) -> (i32, i32, i32, i32) {
    %c0_i32 = arith.constant 0 : i32
    %c0_i32_0 = arith.constant 0 : i32
    %c0_i32_1 = arith.constant 0 : i32
    return %arg0, %arg1, %c0_i32, %c0_i32_0 : i32, i32, i32, i32
  }
}

module attributes {stable_mosaic.version = 11 : i64} {
  func.func @_conv1_stats_kernel(%arg0: i32, %arg1: memref<256x16xf32, #tpu.memory_space<vmem>>, %arg2: memref<16x8xbf16, #tpu.memory_space<vmem>>, %arg3: memref<256x8xbf16, #tpu.memory_space<vmem>>, %arg4: memref<1x2x8xf32, #tpu.memory_space<vmem>>) attributes {dimension_semantics = [#tpu.dimension_semantics<parallel>], iteration_bounds = array<i64: 2>, scalar_prefetch = 0 : i64, scratch_operands = 0 : i64, tpu.core_type = #tpu.core_type<tc>, window_params = [{transform_indices = @transform_0, window_bounds = array<i64: 256, 16>}, {pipeline_mode = #tpu.pipeline_mode<synchronous>, transform_indices = @transform_1, window_bounds = array<i64: 16, 8>}, {transform_indices = @transform_2, window_bounds = array<i64: 256, 8>}, {transform_indices = @transform_3, window_bounds = array<i64: 1, 2, 8>}]} {
    %c0 = arith.constant 0 : index
    %c0_0 = arith.constant 0 : index
    %0 = vector.load %arg1[%c0, %c0_0] : memref<256x16xf32, #tpu.memory_space<vmem>>, vector<256x16xf32>
    %1 = arith.truncf %0 : vector<256x16xf32> to vector<256x16xbf16>
    %c0_1 = arith.constant 0 : index
    %c0_2 = arith.constant 0 : index
    %2 = vector.load %arg2[%c0_1, %c0_2] : memref<16x8xbf16, #tpu.memory_space<vmem>>, vector<16x8xbf16>
    %cst = arith.constant dense<0.000000e+00> : vector<256x8xf32>
    %3 = tpu.matmul %1, %2, %cst {dimension_numbers = #tpu.dot_dimension_numbers<[1], [0], [0], [1], [0, 0, 1, 1], [], []>} : vector<256x16xbf16>, vector<16x8xbf16>, vector<256x8xf32> -> vector<256x8xf32>
    %4 = arith.truncf %3 : vector<256x8xf32> to vector<256x8xbf16>
    %c0_3 = arith.constant 0 : index
    %c0_4 = arith.constant 0 : index
    %5 = vector.load %arg3[%c0_3, %c0_4] : memref<256x8xbf16, #tpu.memory_space<vmem>>, vector<256x8xbf16>
    tpu.vector_store %arg3[%c0_3, %c0_4], %4 {strides = array<i32>} : memref<256x8xbf16, #tpu.memory_space<vmem>>, vector<256x8xbf16>,
    %cst_5 = arith.constant dense<0.000000e+00> : vector<8xf32>
    %6 = vector.multi_reduction <add>, %3, %cst_5 [0] : vector<256x8xf32> to vector<8xf32>
    %7 = arith.mulf %3, %3 : vector<256x8xf32>
    %cst_6 = arith.constant dense<0.000000e+00> : vector<8xf32>
    %8 = vector.multi_reduction <add>, %7, %cst_6 [0] : vector<256x8xf32> to vector<8xf32>
    %9 = vector.shape_cast %6 : vector<8xf32> to vector<1x8xf32>
    %10 = vector.shape_cast %8 : vector<8xf32> to vector<1x8xf32>
    %11 = tpu.concatenate %9, %10 in 0 : vector<1x8xf32>, vector<1x8xf32> -> vector<2x8xf32>
    %12 = vector.shape_cast %11 : vector<2x8xf32> to vector<1x2x8xf32>
    %c0_7 = arith.constant 0 : index
    %c0_8 = arith.constant 0 : index
    %c0_9 = arith.constant 0 : index
    %13 = vector.load %arg4[%c0_7, %c0_8, %c0_9] : memref<1x2x8xf32, #tpu.memory_space<vmem>>, vector<1x2x8xf32>
    tpu.vector_store %arg4[%c0_7, %c0_8, %c0_9], %12 {strides = array<i32>} : memref<1x2x8xf32, #tpu.memory_space<vmem>>, vector<1x2x8xf32>,
    return
  }
  func.func @transform_0(%arg0: i32) -> (i32, i32) {
    %c0_i32 = arith.constant 0 : i32
    %c0_i32_0 = arith.constant 0 : i32
    return %arg0, %c0_i32 : i32, i32
  }
  func.func @transform_1(%arg0: i32) -> (i32, i32) {
    %c0_i32 = arith.constant 0 : i32
    %c0_i32_0 = arith.constant 0 : i32
    %c0_i32_1 = arith.constant 0 : i32
    return %c0_i32, %c0_i32_0 : i32, i32
  }
  func.func @transform_2(%arg0: i32) -> (i32, i32) {
    %c0_i32 = arith.constant 0 : i32
    %c0_i32_0 = arith.constant 0 : i32
    return %arg0, %c0_i32 : i32, i32
  }
  func.func @transform_3(%arg0: i32) -> (i32, i32, i32) {
    %c0_i32 = arith.constant 0 : i32
    %c0_i32_0 = arith.constant 0 : i32
    %c0_i32_1 = arith.constant 0 : i32
    return %arg0, %c0_i32, %c0_i32_0 : i32, i32, i32
  }
}

module attributes {stable_mosaic.version = 11 : i64} {
  func.func @_bn2_residual_kernel(%arg0: i32, %arg1: memref<32x256xbf16, #tpu.memory_space<vmem>>, %arg2: memref<32x256xf32, #tpu.memory_space<vmem>>, %arg3: memref<1x256xf32, #tpu.memory_space<vmem>>, %arg4: memref<1x256xf32, #tpu.memory_space<vmem>>, %arg5: memref<32x256xf32, #tpu.memory_space<vmem>>) attributes {dimension_semantics = [#tpu.dimension_semantics<parallel>], iteration_bounds = array<i64: 1>, scalar_prefetch = 0 : i64, scratch_operands = 0 : i64, tpu.core_type = #tpu.core_type<tc>, window_params = [{transform_indices = @transform_0, window_bounds = array<i64: 32, 256>}, {transform_indices = @transform_1, window_bounds = array<i64: 32, 256>}, {pipeline_mode = #tpu.pipeline_mode<synchronous>, transform_indices = @transform_2, window_bounds = array<i64: 1, 256>}, {pipeline_mode = #tpu.pipeline_mode<synchronous>, transform_indices = @transform_3, window_bounds = array<i64: 1, 256>}, {transform_indices = @transform_4, window_bounds = array<i64: 32, 256>}]} {
    %c0 = arith.constant 0 : index
    %c0_0 = arith.constant 0 : index
    %0 = vector.load %arg1[%c0, %c0_0] : memref<32x256xbf16, #tpu.memory_space<vmem>>, vector<32x256xbf16>
    %1 = arith.extf %0 : vector<32x256xbf16> to vector<32x256xf32>
    %c0_1 = arith.constant 0 : index
    %c0_2 = arith.constant 0 : index
    %2 = vector.load %arg3[%c0_1, %c0_2] : memref<1x256xf32, #tpu.memory_space<vmem>>, vector<1x256xf32>
    %3 = vector.broadcast %2 : vector<1x256xf32> to vector<32x256xf32>
    %4 = arith.mulf %1, %3 : vector<32x256xf32>
    %c0_3 = arith.constant 0 : index
    %c0_4 = arith.constant 0 : index
    %5 = vector.load %arg4[%c0_3, %c0_4] : memref<1x256xf32, #tpu.memory_space<vmem>>, vector<1x256xf32>
    %6 = vector.broadcast %5 : vector<1x256xf32> to vector<32x256xf32>
    %7 = arith.addf %4, %6 : vector<32x256xf32>
    %cst = arith.constant 0.000000e+00 : f32
    %8 = vector.broadcast %cst : f32 to vector<32x256xf32>
    %9 = arith.cmpf ogt, %7, %8 : vector<32x256xf32>
    %cst_5 = arith.constant 1.000000e-01 : f32
    %10 = vector.broadcast %cst_5 : f32 to vector<32x256xf32>
    %11 = arith.mulf %10, %7 : vector<32x256xf32>
    %12 = arith.select %9, %7, %11 : vector<32x256xi1>, vector<32x256xf32>
    %c0_6 = arith.constant 0 : index
    %c0_7 = arith.constant 0 : index
    %13 = vector.load %arg2[%c0_6, %c0_7] : memref<32x256xf32, #tpu.memory_space<vmem>>, vector<32x256xf32>
    %14 = arith.addf %12, %13 : vector<32x256xf32>
    %c0_8 = arith.constant 0 : index
    %c0_9 = arith.constant 0 : index
    %15 = vector.load %arg5[%c0_8, %c0_9] : memref<32x256xf32, #tpu.memory_space<vmem>>, vector<32x256xf32>
    tpu.vector_store %arg5[%c0_8, %c0_9], %14 {strides = array<i32>} : memref<32x256xf32, #tpu.memory_space<vmem>>, vector<32x256xf32>,
    return
  }
  func.func @transform_0(%arg0: i32) -> (i32, i32) {
    %c0_i32 = arith.constant 0 : i32
    %c0_i32_0 = arith.constant 0 : i32
    return %arg0, %c0_i32 : i32, i32
  }
  func.func @transform_1(%arg0: i32) -> (i32, i32) {
    %c0_i32 = arith.constant 0 : i32
    %c0_i32_0 = arith.constant 0 : i32
    return %arg0, %c0_i32 : i32, i32
  }
  func.func @transform_2(%arg0: i32) -> (i32, i32) {
    %c0_i32 = arith.constant 0 : i32
    %c0_i32_0 = arith.constant 0 : i32
    %c0_i32_1 = arith.constant 0 : i32
    return %c0_i32, %c0_i32_0 : i32, i32
  }
  func.func @transform_3(%arg0: i32) -> (i32, i32) {
    %c0_i32 = arith.constant 0 : i32
    %c0_i32_0 = arith.constant 0 : i32
    %c0_i32_1 = arith.constant 0 : i32
    return %c0_i32, %c0_i32_0 : i32, i32
  }
  func.func @transform_4(%arg0: i32) -> (i32, i32) {
    %c0_i32 = arith.constant 0 : i32
    %c0_i32_0 = arith.constant 0 : i32
    return %arg0, %c0_i32 : i32, i32
  }
}

</mosaic_0001>

<llo_original>
// kernel: darknet_block.3
$region0: #{darknet_block.3}
  #allocation0 [shape = 'u32[]', space=smem, size = 0x4, offset = 0x4, fixed_abs, tag = 'smem constant byte address 0x4 - core index']
  #allocation1 [shape = 'u32[144,128]{1,0:T(1,128)}', space=vmem, size = 0x12000, scoped, tag = 'internal scratch']
  %s0 = inlined_call_operand.vmem [shape: f32[512,16], index: 0, kind: input, shape index: {}]
  %s1 = inlined_call_operand.vmem [shape: bf16[16,8], index: 1, kind: input, shape index: {}]
  %s2 = inlined_call_operand.vmem [shape: bf16[512,8], index: 2, kind: output, shape index: {0}]
  %s3 = inlined_call_operand.vmem [shape: f32[2,2,8], index: 3, kind: output, shape index: {1}]
  %4 = xla_tuple %s2, %s3
  %s5 = sld [smem:[#allocation0]]
  $region49: #{darknet_block.3} parent=0
    _
  %s7 = ssub.s32 1, %s5
  %s8 = scalar_select 0, %s7, %s5
  loop: start=0, step=1, limit=4
  $region2: #{darknet_block.3} parent=0 // loop_pre_header
    _
  $region3: #{darknet_block.3} parent=0 // loop_header
    %s10 = sphi 0, %s14
    %p11 = scmp.ge.s32.totalorder %s10, 4
    %s20 = sphi 0, %s22
    %s23 = sphi 0, %s20
    %s24 = sphi 0, %s23
    %s40 = sphi 0, %s24
    %s44 = sphi 0, %s44
    %s46 = sphi 0, %s44
    %s47 = sphi 0, %s46
    %s61 = sphi 0, %s47
    %s67 = sphi 0, %s69
    %s70 = sphi 0, %s67
    %s71 = sphi 0, %s70
    %s87 = sphi 0, %s71
    %s93 = sphi 0, %s95
    %s96 = sphi 0, %s93
    %s97 = sphi 0, %s96
    %s113 = sphi 0, %s97
  $region4: #{darknet_block.3} parent=0 // loop_header_branch
    %13 = sbr.rel (%p11) target = $region8
  $region5: #{darknet_block.3} parent=0 // loop_body
    %s15 = ssub.s32 %s10, 1
    %s16 = ssub.s32 %s10, 2
    %s17 = sadd.s32 %s10, 1
    %s18 = ssub.s32 %s10, %s17
    %p19 = scmp.eq.s32.totalorder %s18, 0
    %s21 = sadd.s32 %s20, 1
    %s22 = scalar_select %p19, %s20, %s21
    %p25 = pneg %p19
    %p26 = scmp.eq.s32.totalorder %s10, 1
    %p27 = por %p25, %p26
    %p28 = scmp.ne.s32.totalorder %s20, %s23
    %p29 = scmp.eq.s32.totalorder %s10, 0
    %p30 = por %p28, %p29
    %p31 = scmp.ne.s32.totalorder %s20, %s23
    %p32 = scmp.eq.s32.totalorder %s15, 1
    %p33 = por %p31, %p32
    %p34 = scmp.ne.s32.totalorder %s23, %s24
    %p35 = scmp.eq.s32.totalorder %s15, 0
    %p36 = por %p34, %p35
    %p37 = scmp.ne.s32.totalorder %s23, %s24
    %p38 = scmp.eq.s32.totalorder %s16, 1
    %p39 = por %p37, %p38
    %p41 = scmp.ne.s32.totalorder %s24, %s40
    %p42 = scmp.eq.s32.totalorder %s16, 0
    %p43 = por %p41, %p42
    %s45 = sadd.s32 %s44, 1
    %p48 = scmp.eq.s32.totalorder %s10, 1
    %p49 = scmp.ne.s32.totalorder %s44, %s46
    %p50 = scmp.eq.s32.totalorder %s10, 0
    %p51 = por %p49, %p50
    %p52 = scmp.ne.s32.totalorder %s44, %s46
    %p53 = scmp.eq.s32.totalorder %s15, 1
    %p54 = por %p52, %p53
    %p55 = scmp.ne.s32.totalorder %s46, %s47
    %p56 = scmp.eq.s32.totalorder %s15, 0
    %p57 = por %p55, %p56
    %p58 = scmp.ne.s32.totalorder %s46, %s47
    %p59 = scmp.eq.s32.totalorder %s16, 1
    %p60 = por %p58, %p59
    %p62 = scmp.ne.s32.totalorder %s47, %s61
    %p63 = scmp.eq.s32.totalorder %s16, 0
    %p64 = por %p62, %p63
    %s65 = ssub.s32 %s10, %s17
    %p66 = scmp.eq.s32.totalorder %s65, 0
    %s68 = sadd.s32 %s67, 1
    %s69 = scalar_select %p66, %s67, %s68
    %p72 = pneg %p66
    %p73 = scmp.eq.s32.totalorder %s10, 1
    %p74 = por %p72, %p73
    %p75 = scmp.ne.s32.totalorder %s67, %s70
    %p76 = scmp.eq.s32.totalorder %s10, 0
    %p77 = por %p75, %p76
    %p78 = scmp.ne.s32.totalorder %s67, %s70
    %p79 = scmp.eq.s32.totalorder %s15, 1
    %p80 = por %p78, %p79
    %p81 = scmp.ne.s32.totalorder %s70, %s71
    %p82 = scmp.eq.s32.totalorder %s15, 0
    %p83 = por %p81, %p82
    %p84 = scmp.ne.s32.totalorder %s70, %s71
    %p85 = scmp.eq.s32.totalorder %s16, 1
    %p86 = por %p84, %p85
    %p88 = scmp.ne.s32.totalorder %s71, %s87
    %p89 = scmp.eq.s32.totalorder %s16, 0
    %p90 = por %p88, %p89
    %s91 = ssub.s32 %s10, %s17
    %p92 = scmp.eq.s32.totalorder %s91, 0
    %s94 = sadd.s32 %s93, 1
    %s95 = scalar_select %p92, %s93, %s94
    %p98 = pneg %p92
    %p99 = scmp.eq.s32.totalorder %s10, 1
    %p100 = por %p98, %p99
    %p101 = scmp.ne.s32.totalorder %s93, %s96
    %p102 = scmp.eq.s32.totalorder %s10, 0
    %p103 = por %p101, %p102
    %p104 = scmp.ne.s32.totalorder %s93, %s96
    %p105 = scmp.eq.s32.totalorder %s15, 1
    %p106 = por %p104, %p105
    %p107 = scmp.ne.s32.totalorder %s96, %s97
    %p108 = scmp.eq.s32.totalorder %s15, 0
    %p109 = por %p107, %p108
    %p110 = scmp.ne.s32.totalorder %s96, %s97
    %p111 = scmp.eq.s32.totalorder %s16, 1
    %p112 = por %p110, %p111
    %p114 = scmp.ne.s32.totalorder %s97, %s113
    %p115 = scmp.eq.s32.totalorder %s16, 0
    %p116 = por %p114, %p115
    %p117 = scmp.le.s32.totalorder 1, %s10
    %p118 = scmp.lt.s32.totalorder %s10, 3
    %p119 = pnand %p117, %p118
    %p120 = pneg %p119
    // Predicated region
    $region9: #{darknet_block.3} parent=5 // pred_check
      _
    $region10: #{darknet_block.3} parent=5 // pred_check_branch
      %122 = sbr.rel (%p119) target = $region12
    $region11: #{darknet_block.3} parent=5 // pred_region
      %s123 = ssub.s32 %s10, 1
      // Predicated region
      $region13: #{darknet_block.3} parent=11 // pred_check
        %p124 = pneg %p57
      $region14: #{darknet_block.3} parent=11 // pred_check_branch
        %126 = sbr.rel (%p124) target = $region16
      $region15: #{darknet_block.3} parent=11 // pred_region
        _
      $region16: #{darknet_block.3} parent=11 // pred_fallthru
        _
    $region12: #{darknet_block.3} parent=5 // pred_fallthru
      _
    %p127 = scmp.lt.s32.totalorder %s10, 2
    // Predicated region
    $region17: #{darknet_block.3} parent=5 // pred_check
      %p128 = pneg %p127
    $region18: #{darknet_block.3} parent=5 // pred_check_branch
      %130 = sbr.rel (%p128) target = $region20
    $region19: #{darknet_block.3} parent=5 // pred_region
      // Predicated region
      $region21: #{darknet_block.3} parent=19 // pred_check
        %p131 = pneg %p30
      $region22: #{darknet_block.3} parent=19 // pred_check_branch
        %133 = sbr.rel (%p131) target = $region24
      $region23: #{darknet_block.3} parent=19 // pred_region
        %s134 = smul.u32 32, %s10
        %p135 = scmp.lt.s32.totalorder %s134, 63
        %s136 = scalar_select %p135, %s134, 63
        %s137 = smul.addr %s136, 8
        %s138 = scalar_lea.vmem %s0, %s137
        %s139 = smul.u32 32, %s10
      $region24: #{darknet_block.3} parent=19 // pred_fallthru
        _
    $region20: #{darknet_block.3} parent=5 // pred_fallthru
      _
    %p140 = scmp.le.s32.totalorder 1, %s10
    %p141 = scmp.lt.s32.totalorder %s10, 3
    %p142 = pnand %p140, %p141
    %p143 = pneg %p142
    // Predicated region
    $region25: #{darknet_block.3} parent=5 // pred_check
      _
    $region26: #{darknet_block.3} parent=5 // pred_check_branch
      %145 = sbr.rel (%p142) target = $region28
    $region27: #{darknet_block.3} parent=5 // pred_region
      %s146 = ssub.s32 %s10, 1
      %s147 = smul.u32 32, %s15
      %p148 = scmp.lt.s32.totalorder %s147, 63
      %s149 = scalar_select %p148, %s147, 63
      %s150 = smul.addr %s149, 8
      %s151 = scalar_lea.vmem %s0, %s150
      %p152 = pneg %p36
      %p153 = pneg %p33
      %p154 = pneg %p57
      %p155 = pneg %p54
      %p156 = pneg %p83
      %p157 = pneg %p80
      %s158 = smul.u32 32, %s15
      %p159 = scmp.lt.s32.totalorder %s158, 63
      %s160 = scalar_select %p159, %s158, 63
      %s161 = smul.addr %s160, 4
      %s162 = scalar_lea.vmem %s2, %s161
      %p163 = pneg %p109
      %p164 = pneg %p106
      %p165 = scmp.lt.s32.totalorder %s15, 1
      %s166 = scalar_select %p165, %s15, 1
      %s167 = smul.addr %s166, 2
      %s168 = scalar_lea.vmem %s3, %s167
      %s169 = smul.u32 32, %s15
      %p170 = scmp.lt.s32.totalorder %s169, 63
      %s171 = scalar_select %p170, %s169, 63
      %s172 = smul.addr %s171, 8
      %s173 = scalar_lea.vmem %s0, %s172
      %s174 = smul.u32 32, %s15
      %s175 = smul.u32 32, %s15
      %p176 = scmp.lt.s32.totalorder %s175, 63
      %s177 = scalar_select %p176, %s175, 63
      %s178 = smul.addr %s177, 4
      %s179 = scalar_lea.vmem %s2, %s178
      %s180 = smul.u32 32, %s15
      %p181 = scmp.lt.s32.totalorder %s15, 1
      %s182 = scalar_select %p181, %s15, 1
      %s183 = smul.addr %s182, 2
      %s184 = scalar_lea.vmem %s3, %s183
      %v186 = vld [vmem:[%s173] sm:$0xff]
      %v187 = vld [vmem:[%s173 + $0x8] sm:$0xff]
      %v188 = vld [vmem:[%s173 + $0x10] sm:$0xff]
      %v189 = vld [vmem:[%s173 + $0x18] sm:$0xff]
      %v190 = vld [vmem:[%s173 + $0x20] sm:$0xff]
      %v191 = vld [vmem:[%s173 + $0x28] sm:$0xff]
      %v192 = vld [vmem:[%s173 + $0x30] sm:$0xff]
      %v193 = vld [vmem:[%s173 + $0x38] sm:$0xff]
      %v194 = vld [vmem:[%s173 + $0x40] sm:$0xff]
      %v195 = vld [vmem:[%s173 + $0x48] sm:$0xff]
      %v196 = vld [vmem:[%s173 + $0x50] sm:$0xff]
      %v197 = vld [vmem:[%s173 + $0x58] sm:$0xff]
      %v198 = vld [vmem:[%s173 + $0x60] sm:$0xff]
      %v199 = vld [vmem:[%s173 + $0x68] sm:$0xff]
      %v200 = vld [vmem:[%s173 + $0x70] sm:$0xff]
      %v201 = vld [vmem:[%s173 + $0x78] sm:$0xff]
      %v202 = vld [vmem:[%s173 + $0x80] sm:$0xff]
      %v203 = vld [vmem:[%s173 + $0x88] sm:$0xff]
      %v204 = vld [vmem:[%s173 + $0x90] sm:$0xff]
      %v205 = vld [vmem:[%s173 + $0x98] sm:$0xff]
      %v206 = vld [vmem:[%s173 + $0xa0] sm:$0xff]
      %v207 = vld [vmem:[%s173 + $0xa8] sm:$0xff]
      %v208 = vld [vmem:[%s173 + $0xb0] sm:$0xff]
      %v209 = vld [vmem:[%s173 + $0xb8] sm:$0xff]
      %v210 = vld [vmem:[%s173 + $0xc0] sm:$0xff]
      %v211 = vld [vmem:[%s173 + $0xc8] sm:$0xff]
      %v212 = vld [vmem:[%s173 + $0xd0] sm:$0xff]
      %v213 = vld [vmem:[%s173 + $0xd8] sm:$0xff]
      %v214 = vld [vmem:[%s173 + $0xe0] sm:$0xff]
      %v215 = vld [vmem:[%s173 + $0xe8] sm:$0xff]
      %v216 = vld [vmem:[%s173 + $0xf0] sm:$0xff]
      %v217 = vld [vmem:[%s173 + $0xf8] sm:$0xff]
      %v218 = vpack.c.bf16 %v187, %v186
      %v219 = vpack.c.bf16 %v189, %v188
      %v220 = vpack.c.bf16 %v191, %v190
      %v221 = vpack.c.bf16 %v193, %v192
      %v222 = vpack.c.bf16 %v195, %v194
      %v223 = vpack.c.bf16 %v197, %v196
      %v224 = vpack.c.bf16 %v199, %v198
      %v225 = vpack.c.bf16 %v201, %v200
      %v226 = vpack.c.bf16 %v203, %v202
      %v227 = vpack.c.bf16 %v205, %v204
      %v228 = vpack.c.bf16 %v207, %v206
      %v229 = vpack.c.bf16 %v209, %v208
      %v230 = vpack.c.bf16 %v211, %v210
      %v231 = vpack.c.bf16 %v213, %v212
      %v232 = vpack.c.bf16 %v215, %v214
      %v233 = vpack.c.bf16 %v217, %v216
      %v234 = vld [vmem:[%s1] sm:$0xf]
      %v235 = vld [vmem:[%s1 + $0x4] sm:$0xf]
      %v238 = vunpack.c.l.b16 %v234
      %v239 = vunpack.c.l.b16 %v235
      %v240 = vpack.c.b16 %v239, %v238
      %vm242 = vcmask 130048
      %v244 = vsel %vm242, %v218, 0
      %v247 = vsel %vm242, %v219, 0
      %v250 = vsel %vm242, %v220, 0
      %v253 = vsel %vm242, %v221, 0
      %v256 = vsel %vm242, %v222, 0
      %v259 = vsel %vm242, %v223, 0
      %v262 = vsel %vm242, %v224, 0
      %v265 = vsel %vm242, %v225, 0
      %v268 = vsel %vm242, %v226, 0
      %v271 = vsel %vm242, %v227, 0
      %v274 = vsel %vm242, %v228, 0
      %v277 = vsel %vm242, %v229, 0
      %v280 = vsel %vm242, %v230, 0
      %v283 = vsel %vm242, %v231, 0
      %v286 = vsel %vm242, %v232, 0
      %v289 = vsel %vm242, %v233, 0
      %291 = vmatprep.subr.bf16.mxu0 0
      %292 = vmatpush1.bf16.msra.mxu0 0
      %293 = vmatprep.subr.bf16.mxu0 0
      %294 = vmatpush1.bf16.msra.mxu0 0
      %295 = vmatprep.subr.bf16.mxu0 0
      %296 = vmatpush1.bf16.msra.mxu0 0
      %297 = vmatprep.subr.bf16.mxu0 0
      %298 = vmatpush1.bf16.msra.mxu0 0
      %299 = vmatprep.subr.bf16.mxu0 0
      %300 = vmatpush1.bf16.msra.mxu0 0
      %301 = vmatprep.subr.bf16.mxu0 0
      %302 = vmatpush1.bf16.msra.mxu0 0
      %303 = vmatprep.subr.bf16.mxu0 0
      %304 = vmatpush1.bf16.msra.mxu0 0
      %305 = vmatprep.subr.bf16.mxu0 0
      %306 = vmatpush1.bf16.msra.mxu0 %v240
      %307 = vmatprep.subr.bf16.mxu0 0
      %308 = vmatpush2.bf16.msra.mxu0 0
      %309 = vmatprep.subr.bf16.mxu0 0
      %310 = vmatpush2.bf16.msra.mxu0 0
      %311 = vmatprep.subr.bf16.mxu0 0
      %312 = vmatpush2.bf16.msra.mxu0 0
      %313 = vmatprep.subr.bf16.mxu0 0
      %314 = vmatpush2.bf16.msra.mxu0 0
      %315 = vmatprep.subr.bf16.mxu0 0
      %316 = vmatpush2.bf16.msra.mxu0 0
      %317 = vmatprep.subr.bf16.mxu0 0
      %318 = vmatpush2.bf16.msra.mxu0 0
      %319 = vmatprep.subr.bf16.mxu0 0
      %320 = vmatpush2.bf16.msra.mxu0 0
      %321 = vmatprep.subr.bf16.mxu0 0
      %322 = vmatpush2.bf16.msra.mxu0 0
      %323 = vmatprep.mubr.bf16.mxu0 0
      %324 = vmatmul.mubr.bf16.gmra.mxu0 %v244
      %v325 = vpop.f32.mrf.mxu0
      %v326 = vadd.f32 0.0, %v325
      %v327 = vpop.f32.mrf.mxu0
      %v328 = vpop.f32.mrf.mxu0
      %v329 = vadd.f32 0.0, %v328
      %v330 = vpop.f32.mrf.mxu0
      %331 = vmatprep.mubr.bf16.mxu0 0
      %332 = vmatmul.mubr.bf16.gmra.mxu0 %v247
      %v333 = vpop.f32.mrf.mxu0
      %v334 = vadd.f32 0.0, %v333
      %v335 = vpop.f32.mrf.mxu0
      %v336 = vpop.f32.mrf.mxu0
      %v337 = vadd.f32 0.0, %v336
      %v338 = vpop.f32.mrf.mxu0
      %339 = vmatprep.mubr.bf16.mxu0 0
      %340 = vmatmul.mubr.bf16.gmra.mxu0 %v250
      %v341 = vpop.f32.mrf.mxu0
      %v342 = vadd.f32 0.0, %v341
      %v343 = vpop.f32.mrf.mxu0
      %v344 = vpop.f32.mrf.mxu0
      %v345 = vadd.f32 0.0, %v344
      %v346 = vpop.f32.mrf.mxu0
      %347 = vmatprep.mubr.bf16.mxu0 0
      %348 = vmatmul.mubr.bf16.gmra.mxu0 %v253
      %v349 = vpop.f32.mrf.mxu0
      %v350 = vadd.f32 0.0, %v349
      %v351 = vpop.f32.mrf.mxu0
      %v352 = vpop.f32.mrf.mxu0
      %v353 = vadd.f32 0.0, %v352
      %v354 = vpop.f32.mrf.mxu0
      %355 = vmatprep.mubr.bf16.mxu0 0
      %356 = vmatmul.mubr.bf16.gmra.mxu0 %v256
      %v357 = vpop.f32.mrf.mxu0
      %v358 = vadd.f32 0.0, %v357
      %v359 = vpop.f32.mrf.mxu0
      %v360 = vpop.f32.mrf.mxu0
      %v361 = vadd.f32 0.0, %v360
      %v362 = vpop.f32.mrf.mxu0
      %363 = vmatprep.mubr.bf16.mxu0 0
      %364 = vmatmul.mubr.bf16.gmra.mxu0 %v259
      %v365 = vpop.f32.mrf.mxu0
      %v366 = vadd.f32 0.0, %v365
      %v367 = vpop.f32.mrf.mxu0
      %v368 = vpop.f32.mrf.mxu0
      %v369 = vadd.f32 0.0, %v368
      %v370 = vpop.f32.mrf.mxu0
      %371 = vmatprep.mubr.bf16.mxu0 0
      %372 = vmatmul.mubr.bf16.gmra.mxu0 %v262
      %v373 = vpop.f32.mrf.mxu0
      %v374 = vadd.f32 0.0, %v373
      %v375 = vpop.f32.mrf.mxu0
      %v376 = vpop.f32.mrf.mxu0
      %v377 = vadd.f32 0.0, %v376
      %v378 = vpop.f32.mrf.mxu0
      %379 = vmatprep.mubr.bf16.mxu0 0
      %380 = vmatmul.mubr.bf16.gmra.mxu0 %v265
      %v381 = vpop.f32.mrf.mxu0
      %v382 = vadd.f32 0.0, %v381
      %v383 = vpop.f32.mrf.mxu0
      %v384 = vpop.f32.mrf.mxu0
      %v385 = vadd.f32 0.0, %v384
      %v386 = vpop.f32.mrf.mxu0
      %387 = vmatprep.mubr.bf16.mxu0 0
      %388 = vmatmul.mubr.bf16.gmra.mxu0 %v268
      %v389 = vpop.f32.mrf.mxu0
      %v390 = vadd.f32 0.0, %v389
      %v391 = vpop.f32.mrf.mxu0
      %v392 = vpop.f32.mrf.mxu0
      %v393 = vadd.f32 0.0, %v392
      %v394 = vpop.f32.mrf.mxu0
      %395 = vmatprep.mubr.bf16.mxu0 0
      %396 = vmatmul.mubr.bf16.gmra.mxu0 %v271
      %v397 = vpop.f32.mrf.mxu0
      %v398 = vadd.f32 0.0, %v397
      %v399 = vpop.f32.mrf.mxu0
      %v400 = vpop.f32.mrf.mxu0
      %v401 = vadd.f32 0.0, %v400
      %v402 = vpop.f32.mrf.mxu0
      %403 = vmatprep.mubr.bf16.mxu0 0
      %404 = vmatmul.mubr.bf16.gmra.mxu0 %v274
      %v405 = vpop.f32.mrf.mxu0
      %v406 = vadd.f32 0.0, %v405
      %v407 = vpop.f32.mrf.mxu0
      %v408 = vpop.f32.mrf.mxu0
      %v409 = vadd.f32 0.0, %v408
      %v410 = vpop.f32.mrf.mxu0
      %411 = vmatprep.mubr.bf16.mxu0 0
      %412 = vmatmul.mubr.bf16.gmra.mxu0 %v277
      %v413 = vpop.f32.mrf.mxu0
      %v414 = vadd.f32 0.0, %v413
      %v415 = vpop.f32.mrf.mxu0
      %v416 = vpop.f32.mrf.mxu0
      %v417 = vadd.f32 0.0, %v416
      %v418 = vpop.f32.mrf.mxu0
      %419 = vmatprep.mubr.bf16.mxu0 0
      %420 = vmatmul.mubr.bf16.gmra.mxu0 %v280
      %v421 = vpop.f32.mrf.mxu0
      %v422 = vadd.f32 0.0, %v421
      %v423 = vpop.f32.mrf.mxu0
      %v424 = vpop.f32.mrf.mxu0
      %v425 = vadd.f32 0.0, %v424
      %v426 = vpop.f32.mrf.mxu0
      %427 = vmatprep.mubr.bf16.mxu0 0
      %428 = vmatmul.mubr.bf16.gmra.mxu0 %v283
      %v429 = vpop.f32.mrf.mxu0
      %v430 = vadd.f32 0.0, %v429
      %v431 = vpop.f32.mrf.mxu0
      %v432 = vpop.f32.mrf.mxu0
      %v433 = vadd.f32 0.0, %v432
      %v434 = vpop.f32.mrf.mxu0
      %435 = vmatprep.mubr.bf16.mxu0 0
      %436 = vmatmul.mubr.bf16.gmra.mxu0 %v286
      %v437 = vpop.f32.mrf.mxu0
      %v438 = vadd.f32 0.0, %v437
      %v439 = vpop.f32.mrf.mxu0
      %v440 = vpop.f32.mrf.mxu0
      %v441 = vadd.f32 0.0, %v440
      %v442 = vpop.f32.mrf.mxu0
      %443 = vmatprep.mubr.bf16.mxu0 0
      %444 = vmatmul.mubr.bf16.gmra.mxu0 %v289
      %v445 = vpop.f32.mrf.mxu0
      %v446 = vadd.f32 0.0, %v445
      %v447 = vpop.f32.mrf.mxu0
      %v448 = vpop.f32.mrf.mxu0
      %v449 = vadd.f32 0.0, %v448
      %v450 = vpop.f32.mrf.mxu0
      %451 = vdwg.mxu0
      %v452 = vpack.c.bf16 %v329, %v326
      %v453 = vpack.c.bf16 %v337, %v334
      %v454 = vpack.c.bf16 %v345, %v342
      %v455 = vpack.c.bf16 %v353, %v350
      %v456 = vpack.c.bf16 %v361, %v358
      %v457 = vpack.c.bf16 %v369, %v366
      %v458 = vpack.c.bf16 %v377, %v374
      %v459 = vpack.c.bf16 %v385, %v382
      %v460 = vpack.c.bf16 %v393, %v390
      %v461 = vpack.c.bf16 %v401, %v398
      %v462 = vpack.c.bf16 %v409, %v406
      %v463 = vpack.c.bf16 %v417, %v414
      %v464 = vpack.c.bf16 %v425, %v422
      %v465 = vpack.c.bf16 %v433, %v430
      %v466 = vpack.c.bf16 %v441, %v438
      %v467 = vpack.c.bf16 %v449, %v446
      %v484 = vunpack.c.l.b16 %v452
      %v485 = vunpack.c.h.b16 %v452
      %v486 = vunpack.c.l.b16 %v453
      %v487 = vunpack.c.h.b16 %v453
      %v488 = vunpack.c.l.b16 %v454
      %v489 = vunpack.c.h.b16 %v454
      %v490 = vunpack.c.l.b16 %v455
      %v491 = vunpack.c.h.b16 %v455
      %v492 = vunpack.c.l.b16 %v456
      %v493 = vunpack.c.h.b16 %v456
      %v494 = vunpack.c.l.b16 %v457
      %v495 = vunpack.c.h.b16 %v457
      %v496 = vunpack.c.l.b16 %v458
      %v497 = vunpack.c.h.b16 %v458
      %v498 = vunpack.c.l.b16 %v459
      %v499 = vunpack.c.h.b16 %v459
      %v500 = vunpack.c.l.b16 %v460
      %v501 = vunpack.c.h.b16 %v460
      %v502 = vunpack.c.l.b16 %v461
      %v503 = vunpack.c.h.b16 %v461
      %v504 = vunpack.c.l.b16 %v462
      %v505 = vunpack.c.h.b16 %v462
      %v506 = vunpack.c.l.b16 %v463
      %v507 = vunpack.c.h.b16 %v463
      %v508 = vunpack.c.l.b16 %v464
      %v509 = vunpack.c.h.b16 %v464
      %v510 = vunpack.c.l.b16 %v465
      %v511 = vunpack.c.h.b16 %v465
      %v512 = vunpack.c.l.b16 %v466
      %v513 = vunpack.c.h.b16 %v466
      %v514 = vunpack.c.l.b16 %v467
      %v515 = vunpack.c.h.b16 %v467
      %v516 = vpack.c.b16 %v484, %v484
      %v517 = vpack.c.b16 %v485, %v485
      %v518 = vpack.c.b16 %v486, %v486
      %v519 = vpack.c.b16 %v487, %v487
      %v520 = vpack.c.b16 %v488, %v488
      %v521 = vpack.c.b16 %v489, %v489
      %v522 = vpack.c.b16 %v490, %v490
      %v523 = vpack.c.b16 %v491, %v491
      %v524 = vpack.c.b16 %v492, %v492
      %v525 = vpack.c.b16 %v493, %v493
      %v526 = vpack.c.b16 %v494, %v494
      %v527 = vpack.c.b16 %v495, %v495
      %v528 = vpack.c.b16 %v496, %v496
      %v529 = vpack.c.b16 %v497, %v497
      %v530 = vpack.c.b16 %v498, %v498
      %v531 = vpack.c.b16 %v499, %v499
      %v532 = vpack.c.b16 %v500, %v500
      %v533 = vpack.c.b16 %v501, %v501
      %v534 = vpack.c.b16 %v502, %v502
      %v535 = vpack.c.b16 %v503, %v503
      %v536 = vpack.c.b16 %v504, %v504
      %v537 = vpack.c.b16 %v505, %v505
      %v538 = vpack.c.b16 %v506, %v506
      %v539 = vpack.c.b16 %v507, %v507
      %v540 = vpack.c.b16 %v508, %v508
      %v541 = vpack.c.b16 %v509, %v509
      %v542 = vpack.c.b16 %v510, %v510
      %v543 = vpack.c.b16 %v511, %v511
      %v544 = vpack.c.b16 %v512, %v512
      %v545 = vpack.c.b16 %v513, %v513
      %v546 = vpack.c.b16 %v514, %v514
      %v547 = vpack.c.b16 %v515, %v515
      %vm580 = vcmask 60416
      %581 = vst.msk [vmem:[%s179] sm:$0xf] %vm580, %v516
      %582 = vst.msk [vmem:[%s179 + $0x4] sm:$0xf] %vm580, %v517
      %583 = vst.msk [vmem:[%s179 + $0x8] sm:$0xf] %vm580, %v518
      %584 = vst.msk [vmem:[%s179 + $0xc] sm:$0xf] %vm580, %v519
      %585 = vst.msk [vmem:[%s179 + $0x10] sm:$0xf] %vm580, %v520
      %586 = vst.msk [vmem:[%s179 + $0x14] sm:$0xf] %vm580, %v521
      %587 = vst.msk [vmem:[%s179 + $0x18] sm:$0xf] %vm580, %v522
      %588 = vst.msk [vmem:[%s179 + $0x1c] sm:$0xf] %vm580, %v523
      %589 = vst.msk [vmem:[%s179 + $0x20] sm:$0xf] %vm580, %v524
      %590 = vst.msk [vmem:[%s179 + $0x24] sm:$0xf] %vm580, %v525
      %591 = vst.msk [vmem:[%s179 + $0x28] sm:$0xf] %vm580, %v526
      %592 = vst.msk [vmem:[%s179 + $0x2c] sm:$0xf] %vm580, %v527
      %593 = vst.msk [vmem:[%s179 + $0x30] sm:$0xf] %vm580, %v528
      %594 = vst.msk [vmem:[%s179 + $0x34] sm:$0xf] %vm580, %v529
      %595 = vst.msk [vmem:[%s179 + $0x38] sm:$0xf] %vm580, %v530
      %596 = vst.msk [vmem:[%s179 + $0x3c] sm:$0xf] %vm580, %v531
      %597 = vst.msk [vmem:[%s179 + $0x40] sm:$0xf] %vm580, %v532
      %598 = vst.msk [vmem:[%s179 + $0x44] sm:$0xf] %vm580, %v533
      %599 = vst.msk [vmem:[%s179 + $0x48] sm:$0xf] %vm580, %v534
      %600 = vst.msk [vmem:[%s179 + $0x4c] sm:$0xf] %vm580, %v535
      %601 = vst.msk [vmem:[%s179 + $0x50] sm:$0xf] %vm580, %v536
      %602 = vst.msk [vmem:[%s179 + $0x54] sm:$0xf] %vm580, %v537
      %603 = vst.msk [vmem:[%s179 + $0x58] sm:$0xf] %vm580, %v538
      %604 = vst.msk [vmem:[%s179 + $0x5c] sm:$0xf] %vm580, %v539
      %605 = vst.msk [vmem:[%s179 + $0x60] sm:$0xf] %vm580, %v540
      %606 = vst.msk [vmem:[%s179 + $0x64] sm:$0xf] %vm580, %v541
      %607 = vst.msk [vmem:[%s179 + $0x68] sm:$0xf] %vm580, %v542
      %608 = vst.msk [vmem:[%s179 + $0x6c] sm:$0xf] %vm580, %v543
      %609 = vst.msk [vmem:[%s179 + $0x70] sm:$0xf] %vm580, %v544
      %610 = vst.msk [vmem:[%s179 + $0x74] sm:$0xf] %vm580, %v545
      %611 = vst.msk [vmem:[%s179 + $0x78] sm:$0xf] %vm580, %v546
      %612 = vst.msk [vmem:[%s179 + $0x7c] sm:$0xf] %vm580, %v547
      %vm613 = vcmask 64512
      %v614 = vsel %vm613, %v326, 0.0
      %v615 = vsel %vm613, %v329, 0.0
      %v616 = vadd.f32 %v614, %v615
      %v617 = vsel %vm613, %v334, 0.0
      %v618 = vadd.f32 %v616, %v617
      %v619 = vsel %vm613, %v337, 0.0
      %v620 = vadd.f32 %v618, %v619
      %v621 = vsel %vm613, %v342, 0.0
      %v622 = vadd.f32 %v620, %v621
      %v623 = vsel %vm613, %v345, 0.0
      %v624 = vadd.f32 %v622, %v623
      %v625 = vsel %vm613, %v350, 0.0
      %v626 = vadd.f32 %v624, %v625
      %v627 = vsel %vm613, %v353, 0.0
      %v628 = vadd.f32 %v626, %v627
      %v629 = vsel %vm613, %v358, 0.0
      %v630 = vadd.f32 %v628, %v629
      %v631 = vsel %vm613, %v361, 0.0
      %v632 = vadd.f32 %v630, %v631
      %v633 = vsel %vm613, %v366, 0.0
      %v634 = vadd.f32 %v632, %v633
      %v635 = vsel %vm613, %v369, 0.0
      %v636 = vadd.f32 %v634, %v635
      %v637 = vsel %vm613, %v374, 0.0
      %v638 = vadd.f32 %v636, %v637
      %v639 = vsel %vm613, %v377, 0.0
      %v640 = vadd.f32 %v638, %v639
      %v641 = vsel %vm613, %v382, 0.0
      %v642 = vadd.f32 %v640, %v641
      %v643 = vsel %vm613, %v385, 0.0
      %v644 = vadd.f32 %v642, %v643
      %v645 = vsel %vm613, %v390, 0.0
      %v646 = vadd.f32 %v644, %v645
      %v647 = vsel %vm613, %v393, 0.0
      %v648 = vadd.f32 %v646, %v647
      %v649 = vsel %vm613, %v398, 0.0
      %v650 = vadd.f32 %v648, %v649
      %v651 = vsel %vm613, %v401, 0.0
      %v652 = vadd.f32 %v650, %v651
      %v653 = vsel %vm613, %v406, 0.0
      %v654 = vadd.f32 %v652, %v653
      %v655 = vsel %vm613, %v409, 0.0
      %v656 = vadd.f32 %v654, %v655
      %v657 = vsel %vm613, %v414, 0.0
      %v658 = vadd.f32 %v656, %v657
      %v659 = vsel %vm613, %v417, 0.0
      %v660 = vadd.f32 %v658, %v659
      %v661 = vsel %vm613, %v422, 0.0
      %v662 = vadd.f32 %v660, %v661
      %v663 = vsel %vm613, %v425, 0.0
      %v664 = vadd.f32 %v662, %v663
      %v665 = vsel %vm613, %v430, 0.0
      %v666 = vadd.f32 %v664, %v665
      %v667 = vsel %vm613, %v433, 0.0
      %v668 = vadd.f32 %v666, %v667
      %v669 = vsel %vm613, %v438, 0.0
      %v670 = vadd.f32 %v668, %v669
      %v671 = vsel %vm613, %v441, 0.0
      %v672 = vadd.f32 %v670, %v671
      %v673 = vsel %vm613, %v446, 0.0
      %v674 = vadd.f32 %v672, %v673
      %v675 = vsel %vm613, %v449, 0.0
      %v676 = vadd.f32 %v674, %v675
      %v677 = vrot.slane %v676, 4
      %v678 = vadd.f32 %v676, %v677
      %v679 = vrot.slane %v678, 2
      %v680 = vadd.f32 %v678, %v679
      %v681 = vrot.slane %v680, 1
      %v682 = vadd.f32 %v680, %v681
      %v683 = vmul.f32 %v326, %v326
      %v684 = vmul.f32 %v329, %v329
      %v685 = vmul.f32 %v334, %v334
      %v686 = vmul.f32 %v337, %v337
      %v687 = vmul.f32 %v342, %v342
      %v688 = vmul.f32 %v345, %v345
      %v689 = vmul.f32 %v350, %v350
      %v690 = vmul.f32 %v353, %v353
      %v691 = vmul.f32 %v358, %v358
      %v692 = vmul.f32 %v361, %v361
      %v693 = vmul.f32 %v366, %v366
      %v694 = vmul.f32 %v369, %v369
      %v695 = vmul.f32 %v374, %v374
      %v696 = vmul.f32 %v377, %v377
      %v697 = vmul.f32 %v382, %v382
      %v698 = vmul.f32 %v385, %v385
      %v699 = vmul.f32 %v390, %v390
      %v700 = vmul.f32 %v393, %v393
      %v701 = vmul.f32 %v398, %v398
      %v702 = vmul.f32 %v401, %v401
      %v703 = vmul.f32 %v406, %v406
      %v704 = vmul.f32 %v409, %v409
      %v705 = vmul.f32 %v414, %v414
      %v706 = vmul.f32 %v417, %v417
      %v707 = vmul.f32 %v422, %v422
      %v708 = vmul.f32 %v425, %v425
      %v709 = vmul.f32 %v430, %v430
      %v710 = vmul.f32 %v433, %v433
      %v711 = vmul.f32 %v438, %v438
      %v712 = vmul.f32 %v441, %v441
      %v713 = vmul.f32 %v446, %v446
      %v714 = vmul.f32 %v449, %v449
      %v715 = vsel %vm613, %v683, 0.0
      %v716 = vsel %vm613, %v684, 0.0
      %v717 = vadd.f32 %v715, %v716
      %v718 = vsel %vm613, %v685, 0.0
      %v719 = vadd.f32 %v717, %v718
      %v720 = vsel %vm613, %v686, 0.0
      %v721 = vadd.f32 %v719, %v720
      %v722 = vsel %vm613, %v687, 0.0
      %v723 = vadd.f32 %v721, %v722
      %v724 = vsel %vm613, %v688, 0.0
      %v725 = vadd.f32 %v723, %v724
      %v726 = vsel %vm613, %v689, 0.0
      %v727 = vadd.f32 %v725, %v726
      %v728 = vsel %vm613, %v690, 0.0
      %v729 = vadd.f32 %v727, %v728
      %v730 = vsel %vm613, %v691, 0.0
      %v731 = vadd.f32 %v729, %v730
      %v732 = vsel %vm613, %v692, 0.0
      %v733 = vadd.f32 %v731, %v732
      %v734 = vsel %vm613, %v693, 0.0
      %v735 = vadd.f32 %v733, %v734
      %v736 = vsel %vm613, %v694, 0.0
      %v737 = vadd.f32 %v735, %v736
      %v738 = vsel %vm613, %v695, 0.0
      %v739 = vadd.f32 %v737, %v738
      %v740 = vsel %vm613, %v696, 0.0
      %v741 = vadd.f32 %v739, %v740
      %v742 = vsel %vm613, %v697, 0.0
      %v743 = vadd.f32 %v741, %v742
      %v744 = vsel %vm613, %v698, 0.0
      %v745 = vadd.f32 %v743, %v744
      %v746 = vsel %vm613, %v699, 0.0
      %v747 = vadd.f32 %v745, %v746
      %v748 = vsel %vm613, %v700, 0.0
      %v749 = vadd.f32 %v747, %v748
      %v750 = vsel %vm613, %v701, 0.0
      %v751 = vadd.f32 %v749, %v750
      %v752 = vsel %vm613, %v702, 0.0
      %v753 = vadd.f32 %v751, %v752
      %v754 = vsel %vm613, %v703, 0.0
      %v755 = vadd.f32 %v753, %v754
      %v756 = vsel %vm613, %v704, 0.0
      %v757 = vadd.f32 %v755, %v756
      %v758 = vsel %vm613, %v705, 0.0
      %v759 = vadd.f32 %v757, %v758
      %v760 = vsel %vm613, %v706, 0.0
      %v761 = vadd.f32 %v759, %v760
      %v762 = vsel %vm613, %v707, 0.0
      %v763 = vadd.f32 %v761, %v762
      %v764 = vsel %vm613, %v708, 0.0
      %v765 = vadd.f32 %v763, %v764
      %v766 = vsel %vm613, %v709, 0.0
      %v767 = vadd.f32 %v765, %v766
      %v768 = vsel %vm613, %v710, 0.0
      %v769 = vadd.f32 %v767, %v768
      %v770 = vsel %vm613, %v711, 0.0
      %v771 = vadd.f32 %v769, %v770
      %v772 = vsel %vm613, %v712, 0.0
      %v773 = vadd.f32 %v771, %v772
      %v774 = vsel %vm613, %v713, 0.0
      %v775 = vadd.f32 %v773, %v774
      %v776 = vsel %vm613, %v714, 0.0
      %v777 = vadd.f32 %v775, %v776
      %v778 = vrot.slane %v777, 4
      %v779 = vadd.f32 %v777, %v778
      %v780 = vrot.slane %v779, 2
      %v781 = vadd.f32 %v779, %v780
      %v782 = vrot.slane %v781, 1
      %v783 = vadd.f32 %v781, %v782
      %vm784 = vcmask 1040384
      %v785 = vsel %vm784, %v682, %v783
      %vm786 = vcmask 58368
      %787 = vst.msk [vmem:[%s184] sm:$0x3] %vm786, %v785
      %s788 = smul.u32 32, %s15
      %p789 = scmp.lt.s32.totalorder %s788, 63
      %s790 = scalar_select %p789, %s788, 63
      %s791 = smul.addr %s790, 4
      %s792 = scalar_lea.vmem %s2, %s791
      %p793 = scmp.lt.s32.totalorder %s15, 1
      %s794 = scalar_select %p793, %s15, 1
      %s795 = smul.addr %s794, 2
      %s796 = scalar_lea.vmem %s3, %s795
      // Predicated region
      $region29: #{darknet_block.3} parent=27 // pred_check
        %p797 = pneg %p80
      $region30: #{darknet_block.3} parent=27 // pred_check_branch
        %799 = sbr.rel (%p797) target = $region32
      $region31: #{darknet_block.3} parent=27 // pred_region
        %s800 = smul.u32 32, %s15
      $region32: #{darknet_block.3} parent=27 // pred_fallthru
        _
      // Predicated region
      $region33: #{darknet_block.3} parent=27 // pred_check
        %p801 = pneg %p106
      $region34: #{darknet_block.3} parent=27 // pred_check_branch
        %803 = sbr.rel (%p801) target = $region36
      $region35: #{darknet_block.3} parent=27 // pred_region
        _
      $region36: #{darknet_block.3} parent=27 // pred_fallthru
        _
    $region28: #{darknet_block.3} parent=5 // pred_fallthru
      _
    %p804 = scmp.le.s32.totalorder 2, %s10
    // Predicated region
    $region37: #{darknet_block.3} parent=5 // pred_check
      %p805 = pneg %p804
    $region38: #{darknet_block.3} parent=5 // pred_check_branch
      %807 = sbr.rel (%p805) target = $region40
    $region39: #{darknet_block.3} parent=5 // pred_region
      %s808 = ssub.s32 %s10, 2
      // Predicated region
      $region41: #{darknet_block.3} parent=39 // pred_check
        %p809 = pneg %p86
      $region42: #{darknet_block.3} parent=39 // pred_check_branch
        %811 = sbr.rel (%p809) target = $region44
      $region43: #{darknet_block.3} parent=39 // pred_region
        %s812 = smul.u32 32, %s16
        %p813 = scmp.lt.s32.totalorder %s812, 63
        %s814 = scalar_select %p813, %s812, 63
        %s815 = smul.addr %s814, 4
        %s816 = scalar_lea.vmem %s2, %s815
      $region44: #{darknet_block.3} parent=39 // pred_fallthru
        _
      // Predicated region
      $region45: #{darknet_block.3} parent=39 // pred_check
        %p817 = pneg %p112
      $region46: #{darknet_block.3} parent=39 // pred_check_branch
        %819 = sbr.rel (%p817) target = $region48
      $region47: #{darknet_block.3} parent=39 // pred_region
        %p820 = scmp.lt.s32.totalorder %s16, 1
        %s821 = scalar_select %p820, %s16, 1
        %s822 = smul.addr %s821, 2
        %s823 = scalar_lea.vmem %s3, %s822
      $region48: #{darknet_block.3} parent=39 // pred_fallthru
        _
    $region40: #{darknet_block.3} parent=5 // pred_fallthru
      _
  $region6: #{darknet_block.3} parent=0 // loop_footer
    %s14 = sadd.s32 1, %s10
  $region7: #{darknet_block.3} parent=0 // loop_footer_branch
    %9 = sbr.rel target = $region3
  $region8: #{darknet_block.3} parent=0 // loop_exit
    _

// kernel: darknet_block.4
$region0: #{darknet_block.4}
  #allocation0 [shape = 'u32[]', space=smem, size = 0x4, offset = 0x4, fixed_abs, tag = 'smem constant byte address 0x4 - core index']
  #allocation1 [shape = 'u32[144,128]{1,0:T(1,128)}', space=vmem, size = 0x12000, scoped, tag = 'internal scratch']
  %s0 = inlined_call_operand.vmem [shape: bf16[2,16,16,8], index: 0, kind: input, shape index: {}, may-alias: {0,1,2}]
  %s1 = inlined_call_operand.vmem [shape: bf16[2,16,16,8], index: 1, kind: input, shape index: {}, may-alias: {0,1,2}]
  %s2 = inlined_call_operand.vmem [shape: bf16[2,16,16,8], index: 2, kind: input, shape index: {}, may-alias: {0,1,2}]
  %s3 = inlined_call_operand.vmem [shape: f32[1,8], index: 3, kind: input, shape index: {}]
  %s4 = inlined_call_operand.vmem [shape: f32[1,8], index: 4, kind: input, shape index: {}]
  %s5 = inlined_call_operand.vmem [shape: bf16[72,16], index: 5, kind: input, shape index: {}]
  %s6 = inlined_call_operand.vmem [shape: bf16[2,16,16,16], index: 6, kind: output, shape index: {0}]
  %s7 = inlined_call_operand.vmem [shape: f32[2,2,2,16], index: 7, kind: output, shape index: {1}]
  %8 = xla_tuple %s6, %s7
  %s9 = sld [smem:[#allocation0]]
  $region65: #{darknet_block.4} parent=0
    _
  %s11 = ssub.s32 1, %s9
  %s12 = scalar_select 0, %s11, %s9
  loop: start=0, step=1, limit=6
  $region2: #{darknet_block.4} parent=0 // loop_pre_header
    _
  $region3: #{darknet_block.4} parent=0 // loop_header
    %s14 = sphi 0, %s18
    %p15 = scmp.ge.s32.totalorder %s14, 6
    %s21 = sphi 0, %s33
    %s22 = sphi 0, %s29
    %s23 = sphi 0, %s21
    %s24 = sphi 0, %s22
    %s25 = sphi 0, %s23
    %s26 = sphi 0, %s24
    %s38 = sphi 0, %s40
    %s41 = sphi 0, %s38
    %s42 = sphi 0, %s41
    %s58 = sphi 0, %s42
    %s74 = sphi 0, %s76
    %s77 = sphi 0, %s74
    %s78 = sphi 0, %s77
    %s94 = sphi 0, %s78
    %s110 = sphi 0, %s112
    %s113 = sphi 0, %s110
    %s114 = sphi 0, %s113
    %s130 = sphi 0, %s114
    %s134 = sphi 0, %s134
    %s136 = sphi 0, %s134
    %s137 = sphi 0, %s136
    %s151 = sphi 0, %s137
    %s155 = sphi 0, %s155
    %s157 = sphi 0, %s155
    %s158 = sphi 0, %s157
    %s172 = sphi 0, %s158
    %s176 = sphi 0, %s176
    %s178 = sphi 0, %s176
    %s179 = sphi 0, %s178
    %s193 = sphi 0, %s179
    %s201 = sphi 0, %s203
    %s204 = sphi 0, %s201
    %s205 = sphi 0, %s204
    %s221 = sphi 0, %s205
    %s229 = sphi 0, %s231
    %s232 = sphi 0, %s229
    %s233 = sphi 0, %s232
    %s249 = sphi 0, %s233
  $region4: #{darknet_block.4} parent=0 // loop_header_branch
    %17 = sbr.rel (%p15) target = $region8
  $region5: #{darknet_block.4} parent=0 // loop_body
    %s19 = ssub.s32 %s14, 1
    %s20 = ssub.s32 %s14, 2
    %s27 = sadd.s32 1, %s22
    %p28 = scmp.ge.s32.totalorder %s27, 2
    %s29 = scalar_select %p28, 0, %s27
    %s30 = sadd.s32 1, %s21
    %s31 = scalar_select %p28, %s30, %s21
    %p32 = scmp.ge.s32.totalorder %s31, 2
    %s33 = scalar_select %p32, 0, %s31
    %s34 = ssub.s32 %s21, %s33
    %s35 = ssub.s32 %s22, %s29
    %s36 = sor.u32 %s34, %s35
    %p37 = scmp.eq.s32.totalorder %s36, 0
    %s39 = sadd.s32 %s38, 1
    %s40 = scalar_select %p37, %s38, %s39
    %p43 = pneg %p37
    %p44 = scmp.eq.s32.totalorder %s14, 3
    %p45 = por %p43, %p44
    %p46 = scmp.ne.s32.totalorder %s38, %s41
    %p47 = scmp.eq.s32.totalorder %s14, 0
    %p48 = por %p46, %p47
    %p49 = scmp.ne.s32.totalorder %s38, %s41
    %p50 = scmp.eq.s32.totalorder %s19, 3
    %p51 = por %p49, %p50
    %p52 = scmp.ne.s32.totalorder %s41, %s42
    %p53 = scmp.eq.s32.totalorder %s19, 0
    %p54 = por %p52, %p53
    %p55 = scmp.ne.s32.totalorder %s41, %s42
    %p56 = scmp.eq.s32.totalorder %s20, 3
    %p57 = por %p55, %p56
    %p59 = scmp.ne.s32.totalorder %s42, %s58
    %p60 = scmp.eq.s32.totalorder %s20, 0
    %p61 = por %p59, %p60
    %s62 = smul.u32 %s22, 8
    %s63 = ssub.s32 %s62, 1
    %p64 = scmp.gt.s32.totalorder %s63, 0
    %s65 = scalar_select %p64, %s63, 0
    %s66 = smul.u32 %s29, 8
    %s67 = ssub.s32 %s66, 1
    %p68 = scmp.gt.s32.totalorder %s67, 0
    %s69 = scalar_select %p68, %s67, 0
    %s70 = ssub.s32 %s21, %s33
    %s71 = ssub.s32 %s65, %s69
    %s72 = sor.u32 %s70, %s71
    %p73 = scmp.eq.s32.totalorder %s72, 0
    %s75 = sadd.s32 %s74, 1
    %s76 = scalar_select %p73, %s74, %s75
    %p79 = pneg %p73
    %p80 = scmp.eq.s32.totalorder %s14, 3
    %p81 = por %p79, %p80
    %p82 = scmp.ne.s32.totalorder %s74, %s77
    %p83 = scmp.eq.s32.totalorder %s14, 0
    %p84 = por %p82, %p83
    %p85 = scmp.ne.s32.totalorder %s74, %s77
    %p86 = scmp.eq.s32.totalorder %s19, 3
    %p87 = por %p85, %p86
    %p88 = scmp.ne.s32.totalorder %s77, %s78
    %p89 = scmp.eq.s32.totalorder %s19, 0
    %p90 = por %p88, %p89
    %p91 = scmp.ne.s32.totalorder %s77, %s78
    %p92 = scmp.eq.s32.totalorder %s20, 3
    %p93 = por %p91, %p92
    %p95 = scmp.ne.s32.totalorder %s78, %s94
    %p96 = scmp.eq.s32.totalorder %s20, 0
    %p97 = por %p95, %p96
    %s98 = sadd.s32 %s22, 1
    %s99 = smul.u32 %s98, 8
    %p100 = scmp.lt.s32.totalorder %s99, 15
    %s101 = scalar_select %p100, %s99, 15
    %s102 = sadd.s32 %s29, 1
    %s103 = smul.u32 %s102, 8
    %p104 = scmp.lt.s32.totalorder %s103, 15
    %s105 = scalar_select %p104, %s103, 15
    %s106 = ssub.s32 %s21, %s33
    %s107 = ssub.s32 %s101, %s105
    %s108 = sor.u32 %s106, %s107
    %p109 = scmp.eq.s32.totalorder %s108, 0
    %s111 = sadd.s32 %s110, 1
    %s112 = scalar_select %p109, %s110, %s111
    %p115 = pneg %p109
    %p116 = scmp.eq.s32.totalorder %s14, 3
    %p117 = por %p115, %p116
    %p118 = scmp.ne.s32.totalorder %s110, %s113
    %p119 = scmp.eq.s32.totalorder %s14, 0
    %p120 = por %p118, %p119
    %p121 = scmp.ne.s32.totalorder %s110, %s113
    %p122 = scmp.eq.s32.totalorder %s19, 3
    %p123 = por %p121, %p122
    %p124 = scmp.ne.s32.totalorder %s113, %s114
    %p125 = scmp.eq.s32.totalorder %s19, 0
    %p126 = por %p124, %p125
    %p127 = scmp.ne.s32.totalorder %s113, %s114
    %p128 = scmp.eq.s32.totalorder %s20, 3
    %p129 = por %p127, %p128
    %p131 = scmp.ne.s32.totalorder %s114, %s130
    %p132 = scmp.eq.s32.totalorder %s20, 0
    %p133 = por %p131, %p132
    %s135 = sadd.s32 %s134, 1
    %p138 = scmp.eq.s32.totalorder %s14, 3
    %p139 = scmp.ne.s32.totalorder %s134, %s136
    %p140 = scmp.eq.s32.totalorder %s14, 0
    %p141 = por %p139, %p140
    %p142 = scmp.ne.s32.totalorder %s134, %s136
    %p143 = scmp.eq.s32.totalorder %s19, 3
    %p144 = por %p142, %p143
    %p145 = scmp.ne.s32.totalorder %s136, %s137
    %p146 = scmp.eq.s32.totalorder %s19, 0
    %p147 = por %p145, %p146
    %p148 = scmp.ne.s32.totalorder %s136, %s137
    %p149 = scmp.eq.s32.totalorder %s20, 3
    %p150 = por %p148, %p149
    %p152 = scmp.ne.s32.totalorder %s137, %s151
    %p153 = scmp.eq.s32.totalorder %s20, 0
    %p154 = por %p152, %p153
    %s156 = sadd.s32 %s155, 1
    %p159 = scmp.eq.s32.totalorder %s14, 3
    %p160 = scmp.ne.s32.totalorder %s155, %s157
    %p161 = scmp.eq.s32.totalorder %s14, 0
    %p162 = por %p160, %p161
    %p163 = scmp.ne.s32.totalorder %s155, %s157
    %p164 = scmp.eq.s32.totalorder %s19, 3
    %p165 = por %p163, %p164
    %p166 = scmp.ne.s32.totalorder %s157, %s158
    %p167 = scmp.eq.s32.totalorder %s19, 0
    %p168 = por %p166, %p167
    %p169 = scmp.ne.s32.totalorder %s157, %s158
    %p170 = scmp.eq.s32.totalorder %s20, 3
    %p171 = por %p169, %p170
    %p173 = scmp.ne.s32.totalorder %s158, %s172
    %p174 = scmp.eq.s32.totalorder %s20, 0
    %p175 = por %p173, %p174
    %s177 = sadd.s32 %s176, 1
    %p180 = scmp.eq.s32.totalorder %s14, 3
    %p181 = scmp.ne.s32.totalorder %s176, %s178
    %p182 = scmp.eq.s32.totalorder %s14, 0
    %p183 = por %p181, %p182
    %p184 = scmp.ne.s32.totalorder %s176, %s178
    %p185 = scmp.eq.s32.totalorder %s19, 3
    %p186 = por %p184, %p185
    %p187 = scmp.ne.s32.totalorder %s178, %s179
    %p188 = scmp.eq.s32.totalorder %s19, 0
    %p189 = por %p187, %p188
    %p190 = scmp.ne.s32.totalorder %s178, %s179
    %p191 = scmp.eq.s32.totalorder %s20, 3
    %p192 = por %p190, %p191
    %p194 = scmp.ne.s32.totalorder %s179, %s193
    %p195 = scmp.eq.s32.totalorder %s20, 0
    %p196 = por %p194, %p195
    %s197 = ssub.s32 %s21, %s33
    %s198 = ssub.s32 %s22, %s29
    %s199 = sor.u32 %s197, %s198
    %p200 = scmp.eq.s32.totalorder %s199, 0
    %s202 = sadd.s32 %s201, 1
    %s203 = scalar_select %p200, %s201, %s202
    %p206 = pneg %p200
    %p207 = scmp.eq.s32.totalorder %s14, 3
    %p208 = por %p206, %p207
    %p209 = scmp.ne.s32.totalorder %s201, %s204
    %p210 = scmp.eq.s32.totalorder %s14, 0
    %p211 = por %p209, %p210
    %p212 = scmp.ne.s32.totalorder %s201, %s204
    %p213 = scmp.eq.s32.totalorder %s19, 3
    %p214 = por %p212, %p213
    %p215 = scmp.ne.s32.totalorder %s204, %s205
    %p216 = scmp.eq.s32.totalorder %s19, 0
    %p217 = por %p215, %p216
    %p218 = scmp.ne.s32.totalorder %s204, %s205
    %p219 = scmp.eq.s32.totalorder %s20, 3
    %p220 = por %p218, %p219
    %p222 = scmp.ne.s32.totalorder %s205, %s221
    %p223 = scmp.eq.s32.totalorder %s20, 0
    %p224 = por %p222, %p223
    %s225 = ssub.s32 %s21, %s33
    %s226 = ssub.s32 %s22, %s29
    %s227 = sor.u32 %s225, %s226
    %p228 = scmp.eq.s32.totalorder %s227, 0
    %s230 = sadd.s32 %s229, 1
    %s231 = scalar_select %p228, %s229, %s230
    %p234 = pneg %p228
    %p235 = scmp.eq.s32.totalorder %s14, 3
    %p236 = por %p234, %p235
    %p237 = scmp.ne.s32.totalorder %s229, %s232
    %p238 = scmp.eq.s32.totalorder %s14, 0
    %p239 = por %p237, %p238
    %p240 = scmp.ne.s32.totalorder %s229, %s232
    %p241 = scmp.eq.s32.totalorder %s19, 3
    %p242 = por %p240, %p241
    %p243 = scmp.ne.s32.totalorder %s232, %s233
    %p244 = scmp.eq.s32.totalorder %s19, 0
    %p245 = por %p243, %p244
    %p246 = scmp.ne.s32.totalorder %s232, %s233
    %p247 = scmp.eq.s32.totalorder %s20, 3
    %p248 = por %p246, %p247
    %p250 = scmp.ne.s32.totalorder %s233, %s249
    %p251 = scmp.eq.s32.totalorder %s20, 0
    %p252 = por %p250, %p251
    %p253 = scmp.le.s32.totalorder 1, %s14
    %p254 = scmp.lt.s32.totalorder %s14, 5
    %p255 = pnand %p253, %p254
    %p256 = pneg %p255
    // Predicated region
    $region9: #{darknet_block.4} parent=5 // pred_check
      _
    $region10: #{darknet_block.4} parent=5 // pred_check_branch
      %258 = sbr.rel (%p255) target = $region12
    $region11: #{darknet_block.4} parent=5 // pred_region
      %s259 = ssub.s32 %s14, 1
      // Predicated region
      $region13: #{darknet_block.4} parent=11 // pred_check
        %p260 = pneg %p147
      $region14: #{darknet_block.4} parent=11 // pred_check_branch
        %262 = sbr.rel (%p260) target = $region16
      $region15: #{darknet_block.4} parent=11 // pred_region
        _
      $region16: #{darknet_block.4} parent=11 // pred_fallthru
        _
      // Predicated region
      $region17: #{darknet_block.4} parent=11 // pred_check
        %p263 = pneg %p168
      $region18: #{darknet_block.4} parent=11 // pred_check_branch
        %265 = sbr.rel (%p263) target = $region20
      $region19: #{darknet_block.4} parent=11 // pred_region
        _
      $region20: #{darknet_block.4} parent=11 // pred_fallthru
        _
      // Predicated region
      $region21: #{darknet_block.4} parent=11 // pred_check
        %p266 = pneg %p189
      $region22: #{darknet_block.4} parent=11 // pred_check_branch
        %268 = sbr.rel (%p266) target = $region24
      $region23: #{darknet_block.4} parent=11 // pred_region
        _
      $region24: #{darknet_block.4} parent=11 // pred_fallthru
        _
    $region12: #{darknet_block.4} parent=5 // pred_fallthru
      _
    %p269 = scmp.lt.s32.totalorder %s14, 4
    // Predicated region
    $region25: #{darknet_block.4} parent=5 // pred_check
      %p270 = pneg %p269
    $region26: #{darknet_block.4} parent=5 // pred_check_branch
      %272 = sbr.rel (%p270) target = $region28
    $region27: #{darknet_block.4} parent=5 // pred_region
      // Predicated region
      $region29: #{darknet_block.4} parent=27 // pred_check
        %p273 = pneg %p48
      $region30: #{darknet_block.4} parent=27 // pred_check_branch
        %275 = sbr.rel (%p273) target = $region32
      $region31: #{darknet_block.4} parent=27 // pred_region
        %s276 = smul.u32 8, %s22
        %p277 = scmp.lt.s32.totalorder %s21, 1
        %s278 = scalar_select %p277, %s21, 1
        %p279 = scmp.lt.s32.totalorder %s276, 15
        %s280 = scalar_select %p279, %s276, 15
        %s281 = smul.addr %s280, 2
        %s282 = smul.addr %s278, 32
        %s283 = sadd.s32 %s281, %s282
        %s284 = smul.addr %s283, 4
        %s285 = scalar_lea.vmem %s0, %s284
        %s286 = smul.u32 8, %s22
      $region32: #{darknet_block.4} parent=27 // pred_fallthru
        _
      // Predicated region
      $region33: #{darknet_block.4} parent=27 // pred_check
        %p287 = pneg %p84
      $region34: #{darknet_block.4} parent=27 // pred_check_branch
        %289 = sbr.rel (%p287) target = $region36
      $region35: #{darknet_block.4} parent=27 // pred_region
        %s290 = smul.u32 %s22, 8
        %s291 = ssub.s32 %s290, 1
        %p292 = scmp.gt.s32.totalorder %s291, 0
        %s293 = scalar_select %p292, %s291, 0
        %p294 = scmp.lt.s32.totalorder %s21, 1
        %s295 = scalar_select %p294, %s21, 1
        %p296 = scmp.lt.s32.totalorder %s293, 15
        %s297 = scalar_select %p296, %s293, 15
        %s298 = smul.addr %s297, 2
        %s299 = smul.addr %s295, 32
        %s300 = sadd.s32 %s298, %s299
        %s301 = smul.addr %s300, 4
        %s302 = scalar_lea.vmem %s1, %s301
        %s303 = smul.u32 %s22, 8
        %s304 = ssub.s32 %s303, 1
        %p305 = scmp.gt.s32.totalorder %s304, 0
        %s306 = scalar_select %p305, %s304, 0
      $region36: #{darknet_block.4} parent=27 // pred_fallthru
        _
      // Predicated region
      $region37: #{darknet_block.4} parent=27 // pred_check
        %p307 = pneg %p120
      $region38: #{darknet_block.4} parent=27 // pred_check_branch
        %309 = sbr.rel (%p307) target = $region40
      $region39: #{darknet_block.4} parent=27 // pred_region
        %s310 = sadd.s32 %s22, 1
        %s311 = smul.u32 %s310, 8
        %p312 = scmp.lt.s32.totalorder %s311, 15
        %s313 = scalar_select %p312, %s311, 15
        %p314 = scmp.lt.s32.totalorder %s21, 1
        %s315 = scalar_select %p314, %s21, 1
        %p316 = scmp.lt.s32.totalorder %s313, 15
        %s317 = scalar_select %p316, %s313, 15
        %s318 = smul.addr %s317, 2
        %s319 = smul.addr %s315, 32
        %s320 = sadd.s32 %s318, %s319
        %s321 = smul.addr %s320, 4
        %s322 = scalar_lea.vmem %s2, %s321
        %s323 = sadd.s32 %s22, 1
        %s324 = smul.u32 %s323, 8
        %p325 = scmp.lt.s32.totalorder %s324, 15
        %s326 = scalar_select %p325, %s324, 15
      $region40: #{darknet_block.4} parent=27 // pred_fallthru
        _
    $region28: #{darknet_block.4} parent=5 // pred_fallthru
      _
    %p327 = scmp.le.s32.totalorder 1, %s14
    %p328 = scmp.lt.s32.totalorder %s14, 5
    %p329 = pnand %p327, %p328
    %p330 = pneg %p329
    // Predicated region
    $region41: #{darknet_block.4} parent=5 // pred_check
      _
    $region42: #{darknet_block.4} parent=5 // pred_check_branch
      %332 = sbr.rel (%p329) target = $region44
    $region43: #{darknet_block.4} parent=5 // pred_region
      %s333 = ssub.s32 %s14, 1
      %s334 = smul.u32 8, %s24
      %p335 = scmp.lt.s32.totalorder %s23, 1
      %s336 = scalar_select %p335, %s23, 1
      %p337 = scmp.lt.s32.totalorder %s334, 15
      %s338 = scalar_select %p337, %s334, 15
      %s339 = smul.addr %s338, 2
      %s340 = smul.addr %s336, 32
      %s341 = sadd.s32 %s339, %s340
      %s342 = smul.addr %s341, 4
      %s343 = scalar_lea.vmem %s0, %s342
      %p344 = pneg %p54
      %p345 = pneg %p51
      %s346 = smul.u32 %s24, 8
      %s347 = ssub.s32 %s346, 1
      %p348 = scmp.gt.s32.totalorder %s347, 0
      %s349 = scalar_select %p348, %s347, 0
      %p350 = scmp.lt.s32.totalorder %s23, 1
      %s351 = scalar_select %p350, %s23, 1
      %p352 = scmp.lt.s32.totalorder %s349, 15
      %s353 = scalar_select %p352, %s349, 15
      %s354 = smul.addr %s353, 2
      %s355 = smul.addr %s351, 32
      %s356 = sadd.s32 %s354, %s355
      %s357 = smul.addr %s356, 4
      %s358 = scalar_lea.vmem %s1, %s357
      %p359 = pneg %p90
      %p360 = pneg %p87
      %s361 = sadd.s32 %s24, 1
      %s362 = smul.u32 %s361, 8
      %p363 = scmp.lt.s32.totalorder %s362, 15
      %s364 = scalar_select %p363, %s362, 15
      %p365 = scmp.lt.s32.totalorder %s23, 1
      %s366 = scalar_select %p365, %s23, 1
      %p367 = scmp.lt.s32.totalorder %s364, 15
      %s368 = scalar_select %p367, %s364, 15
      %s369 = smul.addr %s368, 2
      %s370 = smul.addr %s366, 32
      %s371 = sadd.s32 %s369, %s370
      %s372 = smul.addr %s371, 4
      %s373 = scalar_lea.vmem %s2, %s372
      %p374 = pneg %p126
      %p375 = pneg %p123
      %p376 = pneg %p147
      %p377 = pneg %p144
      %p378 = pneg %p168
      %p379 = pneg %p165
      %p380 = pneg %p189
      %p381 = pneg %p186
      %p382 = pneg %p217
      %p383 = pneg %p214
      %s384 = smul.u32 8, %s24
      %p385 = scmp.lt.s32.totalorder %s23, 1
      %s386 = scalar_select %p385, %s23, 1
      %p387 = scmp.lt.s32.totalorder %s384, 15
      %s388 = scalar_select %p387, %s384, 15
      %s389 = smul.addr %s388, 2
      %s390 = smul.addr %s386, 32
      %s391 = sadd.s32 %s389, %s390
      %s392 = smul.addr %s391, 4
      %s393 = scalar_lea.vmem %s6, %s392
      %p394 = pneg %p245
      %p395 = pneg %p242
      %p396 = scmp.lt.s32.totalorder %s23, 1
      %s397 = scalar_select %p396, %s23, 1
      %p398 = scmp.lt.s32.totalorder %s24, 1
      %s399 = scalar_select %p398, %s24, 1
      %s400 = smul.addr %s397, 2
      %s401 = sadd.s32 %s399, %s400
      %s402 = smul.addr %s401, 2
      %s403 = scalar_lea.vmem %s7, %s402
      %s404 = smul.u32 8, %s24
      %p405 = scmp.lt.s32.totalorder %s23, 1
      %s406 = scalar_select %p405, %s23, 1
      %p407 = scmp.lt.s32.totalorder %s404, 15
      %s408 = scalar_select %p407, %s404, 15
      %s409 = smul.addr %s408, 2
      %s410 = smul.addr %s406, 32
      %s411 = sadd.s32 %s409, %s410
      %s412 = smul.addr %s411, 4
      %s413 = scalar_lea.vmem %s0, %s412
      %s414 = smul.u32 8, %s24
      %s415 = smul.u32 %s24, 8
      %s416 = ssub.s32 %s415, 1
      %p417 = scmp.gt.s32.totalorder %s416, 0
      %s418 = scalar_select %p417, %s416, 0
      %p419 = scmp.lt.s32.totalorder %s23, 1
      %s420 = scalar_select %p419, %s23, 1
      %p421 = scmp.lt.s32.totalorder %s418, 15
      %s422 = scalar_select %p421, %s418, 15
      %s423 = smul.addr %s422, 2
      %s424 = smul.addr %s420, 32
      %s425 = sadd.s32 %s423, %s424
      %s426 = smul.addr %s425, 4
      %s427 = scalar_lea.vmem %s1, %s426
      %s428 = smul.u32 %s24, 8
      %s429 = ssub.s32 %s428, 1
      %p430 = scmp.gt.s32.totalorder %s429, 0
      %s431 = scalar_select %p430, %s429, 0
      %s432 = sadd.s32 %s24, 1
      %s433 = smul.u32 %s432, 8
      %p434 = scmp.lt.s32.totalorder %s433, 15
      %s435 = scalar_select %p434, %s433, 15
      %p436 = scmp.lt.s32.totalorder %s23, 1
      %s437 = scalar_select %p436, %s23, 1
      %p438 = scmp.lt.s32.totalorder %s435, 15
      %s439 = scalar_select %p438, %s435, 15
      %s440 = smul.addr %s439, 2
      %s441 = smul.addr %s437, 32
      %s442 = sadd.s32 %s440, %s441
      %s443 = smul.addr %s442, 4
      %s444 = scalar_lea.vmem %s2, %s443
      %s445 = sadd.s32 %s24, 1
      %s446 = smul.u32 %s445, 8
      %p447 = scmp.lt.s32.totalorder %s446, 15
      %s448 = scalar_select %p447, %s446, 15
      %s449 = smul.u32 8, %s24
      %p450 = scmp.lt.s32.totalorder %s23, 1
      %s451 = scalar_select %p450, %s23, 1
      %p452 = scmp.lt.s32.totalorder %s449, 15
      %s453 = scalar_select %p452, %s449, 15
      %s454 = smul.addr %s453, 2
      %s455 = smul.addr %s451, 32
      %s456 = sadd.s32 %s454, %s455
      %s457 = smul.addr %s456, 4
      %s458 = scalar_lea.vmem %s6, %s457
      %s459 = smul.u32 8, %s24
      %p460 = scmp.lt.s32.totalorder %s23, 1
      %s461 = scalar_select %p460, %s23, 1
      %p462 = scmp.lt.s32.totalorder %s24, 1
      %s463 = scalar_select %p462, %s24, 1
      %s464 = smul.addr %s461, 2
      %s465 = sadd.s32 %s463, %s464
      %s466 = smul.addr %s465, 2
      %s467 = scalar_lea.vmem %s7, %s466
      %v469 = vld [vmem:[%s3] sm:$0x1]
      %v470 = vld [vmem:[%s4] sm:$0x1]
      %v471 = vld [vmem:[%s413] sm:$0xf]
      %v472 = vld [vmem:[%s413 + $0x4] sm:$0xf]
      %v473 = vld [vmem:[%s413 + $0x8] sm:$0xf]
      %v474 = vld [vmem:[%s413 + $0xc] sm:$0xf]
      %v475 = vld [vmem:[%s413 + $0x10] sm:$0xf]
      %v476 = vld [vmem:[%s413 + $0x14] sm:$0xf]
      %v477 = vld [vmem:[%s413 + $0x18] sm:$0xf]
      %v478 = vld [vmem:[%s413 + $0x1c] sm:$0xf]
      %v479 = vld [vmem:[%s413 + $0x20] sm:$0xf]
      %v480 = vld [vmem:[%s413 + $0x24] sm:$0xf]
      %v481 = vld [vmem:[%s413 + $0x28] sm:$0xf]
      %v482 = vld [vmem:[%s413 + $0x2c] sm:$0xf]
      %v483 = vld [vmem:[%s413 + $0x30] sm:$0xf]
      %v484 = vld [vmem:[%s413 + $0x34] sm:$0xf]
      %v485 = vld [vmem:[%s413 + $0x38] sm:$0xf]
      %v486 = vld [vmem:[%s413 + $0x3c] sm:$0xf]
      %v487 = vunpack.c.l.bf16 %v471
      %v488 = vunpack.c.l.bf16 %v472
      %v489 = vunpack.c.l.bf16 %v473
      %v490 = vunpack.c.l.bf16 %v474
      %v491 = vunpack.c.l.bf16 %v475
      %v492 = vunpack.c.l.bf16 %v476
      %v493 = vunpack.c.l.bf16 %v477
      %v494 = vunpack.c.l.bf16 %v478
      %v495 = vunpack.c.l.bf16 %v479
      %v496 = vunpack.c.l.bf16 %v480
      %v497 = vunpack.c.l.bf16 %v481
      %v498 = vunpack.c.l.bf16 %v482
      %v499 = vunpack.c.l.bf16 %v483
      %v500 = vunpack.c.l.bf16 %v484
      %v501 = vunpack.c.l.bf16 %v485
      %v502 = vunpack.c.l.bf16 %v486
      %v504 = vlaneseq
      %v505 = vshrl.u32 %v504, 7
      %v506 = vsub.s32 0, %v505
      %v507 = vrot.slane %v469, %v506
      %v509 = vmul.f32 %v487, %v507
      %v510 = vmul.f32 %v488, %v507
      %v511 = vmul.f32 %v489, %v507
      %v512 = vmul.f32 %v490, %v507
      %v513 = vmul.f32 %v491, %v507
      %v514 = vmul.f32 %v492, %v507
      %v515 = vmul.f32 %v493, %v507
      %v516 = vmul.f32 %v494, %v507
      %v517 = vmul.f32 %v495, %v507
      %v518 = vmul.f32 %v496, %v507
      %v519 = vmul.f32 %v497, %v507
      %v520 = vmul.f32 %v498, %v507
      %v521 = vmul.f32 %v499, %v507
      %v522 = vmul.f32 %v500, %v507
      %v523 = vmul.f32 %v501, %v507
      %v524 = vmul.f32 %v502, %v507
      %v526 = vlaneseq
      %v527 = vshrl.u32 %v526, 7
      %v528 = vsub.s32 0, %v527
      %v529 = vrot.slane %v470, %v528
      %v531 = vadd.f32 %v509, %v529
      %v532 = vadd.f32 %v510, %v529
      %v533 = vadd.f32 %v511, %v529
      %v534 = vadd.f32 %v512, %v529
      %v535 = vadd.f32 %v513, %v529
      %v536 = vadd.f32 %v514, %v529
      %v537 = vadd.f32 %v515, %v529
      %v538 = vadd.f32 %v516, %v529
      %v539 = vadd.f32 %v517, %v529
      %v540 = vadd.f32 %v518, %v529
      %v541 = vadd.f32 %v519, %v529
      %v542 = vadd.f32 %v520, %v529
      %v543 = vadd.f32 %v521, %v529
      %v544 = vadd.f32 %v522, %v529
      %v545 = vadd.f32 %v523, %v529
      %v546 = vadd.f32 %v524, %v529
      %vm547 = vcmp.gt.f32.partialorder %v531, 0.0
      %vm548 = vcmp.gt.f32.partialorder %v532, 0.0
      %vm549 = vcmp.gt.f32.partialorder %v533, 0.0
      %vm550 = vcmp.gt.f32.partialorder %v534, 0.0
      %vm551 = vcmp.gt.f32.partialorder %v535, 0.0
      %vm552 = vcmp.gt.f32.partialorder %v536, 0.0
      %vm553 = vcmp.gt.f32.partialorder %v537, 0.0
      %vm554 = vcmp.gt.f32.partialorder %v538, 0.0
      %vm555 = vcmp.gt.f32.partialorder %v539, 0.0
      %vm556 = vcmp.gt.f32.partialorder %v540, 0.0
      %vm557 = vcmp.gt.f32.partialorder %v541, 0.0
      %vm558 = vcmp.gt.f32.partialorder %v542, 0.0
      %vm559 = vcmp.gt.f32.partialorder %v543, 0.0
      %vm560 = vcmp.gt.f32.partialorder %v544, 0.0
      %vm561 = vcmp.gt.f32.partialorder %v545, 0.0
      %vm562 = vcmp.gt.f32.partialorder %v546, 0.0
      %v563 = vmul.f32 %v531, 0.1
      %v564 = vmul.f32 %v532, 0.1
      %v565 = vmul.f32 %v533, 0.1
      %v566 = vmul.f32 %v534, 0.1
      %v567 = vmul.f32 %v535, 0.1
      %v568 = vmul.f32 %v536, 0.1
      %v569 = vmul.f32 %v537, 0.1
      %v570 = vmul.f32 %v538, 0.1
      %v571 = vmul.f32 %v539, 0.1
      %v572 = vmul.f32 %v540, 0.1
      %v573 = vmul.f32 %v541, 0.1
      %v574 = vmul.f32 %v542, 0.1
      %v575 = vmul.f32 %v543, 0.1
      %v576 = vmul.f32 %v544, 0.1
      %v577 = vmul.f32 %v545, 0.1
      %v578 = vmul.f32 %v546, 0.1
      %v579 = vsel %vm547, %v531, %v563
      %v580 = vsel %vm548, %v532, %v564
      %v581 = vsel %vm549, %v533, %v565
      %v582 = vsel %vm550, %v534, %v566
      %v583 = vsel %vm551, %v535, %v567
      %v584 = vsel %vm552, %v536, %v568
      %v585 = vsel %vm553, %v537, %v569
      %v586 = vsel %vm554, %v538, %v570
      %v587 = vsel %vm555, %v539, %v571
      %v588 = vsel %vm556, %v540, %v572
      %v589 = vsel %vm557, %v541, %v573
      %v590 = vsel %vm558, %v542, %v574
      %v591 = vsel %vm559, %v543, %v575
      %v592 = vsel %vm560, %v544, %v576
      %v593 = vsel %vm561, %v545, %v577
      %v594 = vsel %vm562, %v546, %v578
      %v595 = vpack.c.bf16 %v580, %v579
      %v596 = vpack.c.bf16 %v582, %v581
      %v597 = vpack.c.bf16 %v584, %v583
      %v598 = vpack.c.bf16 %v586, %v585
      %v599 = vpack.c.bf16 %v588, %v587
      %v600 = vpack.c.bf16 %v590, %v589
      %v601 = vpack.c.bf16 %v592, %v591
      %v602 = vpack.c.bf16 %v594, %v593
      %p603 = scmp.gt.s32.totalorder %s24, 0
      %v604 = vld [vmem:[%s427] sm:$0xf]
      %v605 = vld [vmem:[%s427 + $0x4] sm:$0xf]
      %v606 = vunpack.c.l.bf16 %v604
      %v607 = vunpack.c.l.bf16 %v605
      %v608 = vmul.f32 %v606, %v507
      %v609 = vmul.f32 %v607, %v507
      %v610 = vadd.f32 %v608, %v529
      %v611 = vadd.f32 %v609, %v529
      %vm612 = vcmp.gt.f32.partialorder %v610, 0.0
      %vm613 = vcmp.gt.f32.partialorder %v611, 0.0
      %v614 = vmul.f32 %v610, 0.1
      %v615 = vmul.f32 %v611, 0.1
      %v616 = vsel %vm612, %v610, %v614
      %v617 = vsel %vm613, %v611, %v615
      %s618 = scalar_select %p603, 1, 0
      %v619 = vstv %s618
      %vm620 = vcmp.eq.s32.totalorder %v619, 1
      %v621 = vsel %vm620, %v616, 0.0
      %v622 = vsel %vm620, %v617, 0.0
      %v623 = vpack.c.bf16 %v622, %v621
      %p624 = scmp.lt.s32.totalorder %s24, 1
      %v625 = vld [vmem:[%s444] sm:$0xf]
      %v626 = vld [vmem:[%s444 + $0x4] sm:$0xf]
      %v627 = vunpack.c.l.bf16 %v625
      %v628 = vunpack.c.l.bf16 %v626
      %v629 = vmul.f32 %v627, %v507
      %v630 = vmul.f32 %v628, %v507
      %v631 = vadd.f32 %v629, %v529
      %v632 = vadd.f32 %v630, %v529
      %vm633 = vcmp.gt.f32.partialorder %v631, 0.0
      %vm634 = vcmp.gt.f32.partialorder %v632, 0.0
      %v635 = vmul.f32 %v631, 0.1
      %v636 = vmul.f32 %v632, 0.1
      %v637 = vsel %vm633, %v631, %v635
      %v638 = vsel %vm634, %v632, %v636
      %s639 = scalar_select %p624, 1, 0
      %v640 = vstv %s639
      %vm641 = vcmp.eq.s32.totalorder %v640, 1
      %v642 = vsel %vm641, %v637, 0.0
      %v643 = vsel %vm641, %v638, 0.0
      %v644 = vpack.c.bf16 %v643, %v642
      %v646 = vshrl.u32 %v623, 16
      %v648 = vrot.slane %v646, 7
      %v649 = vshll.u32 %v623, 16
      %v651 = vor.u32 %v648, %v649
      %v653 = vshrl.u32 %v595, 16
      %v655 = vrot.slane %v653, 7
      %v656 = vshll.u32 %v595, 16
      %v658 = vor.u32 %v655, %v656
      %v660 = vshrl.u32 %v596, 16
      %v662 = vrot.slane %v660, 7
      %v663 = vshll.u32 %v596, 16
      %v665 = vor.u32 %v662, %v663
      %v667 = vshrl.u32 %v597, 16
      %v669 = vrot.slane %v667, 7
      %v670 = vshll.u32 %v597, 16
      %v672 = vor.u32 %v669, %v670
      %v674 = vshrl.u32 %v598, 16
      %v676 = vrot.slane %v674, 7
      %v677 = vshll.u32 %v598, 16
      %v679 = vor.u32 %v676, %v677
      %v681 = vshrl.u32 %v599, 16
      %v683 = vrot.slane %v681, 7
      %v684 = vshll.u32 %v599, 16
      %v686 = vor.u32 %v683, %v684
      %v688 = vshrl.u32 %v600, 16
      %v690 = vrot.slane %v688, 7
      %v691 = vshll.u32 %v600, 16
      %v693 = vor.u32 %v690, %v691
      %v695 = vshrl.u32 %v601, 16
      %v697 = vrot.slane %v695, 7
      %v698 = vshll.u32 %v601, 16
      %v700 = vor.u32 %v697, %v698
      %v702 = vshrl.u32 %v602, 16
      %v704 = vrot.slane %v702, 7
      %v705 = vshll.u32 %v602, 16
      %v707 = vor.u32 %v704, %v705
      %v709 = vshrl.u32 %v644, 16
      %v711 = vrot.slane %v709, 7
      %v712 = vshll.u32 %v644, 16
      %v714 = vor.u32 %v711, %v712
      %vm735 = vcmask 1040384
      %vm736 = vsmask.f32 256
      %vm737 = vmand %vm735, %vm736
      %v738 = vsel %vm737, 0, %v651
      %v739 = vsel %vm737, 0, %v658
      %v740 = vsel %vm737, 0, %v665
      %v741 = vsel %vm737, 0, %v672
      %v742 = vsel %vm737, 0, %v679
      %v743 = vsel %vm737, 0, %v686
      %v744 = vsel %vm737, 0, %v693
      %v745 = vsel %vm737, 0, %v700
      %v746 = vsel %vm737, 0, %v707
      %v747 = vsel %vm737, 0, %v714
      %v748 = vsel %vm737, %v648, 0
      %v749 = vsel %vm737, %v655, 0
      %v750 = vsel %vm737, %v662, 0
      %v751 = vsel %vm737, %v669, 0
      %v752 = vsel %vm737, %v676, 0
      %v753 = vsel %vm737, %v683, 0
      %v754 = vsel %vm737, %v690, 0
      %v755 = vsel %vm737, %v697, 0
      %v756 = vsel %vm737, %v704, 0
      %v757 = vsel %vm737, %v711, 0
      %vm758 = vsmask.f32 7424
      %v760 = vshrl.u32 %v738, 16
      %v762 = vshll.u32 %v738, 16
      %v764 = vrot.slane %v762, 1
      %v765 = vor.u32 %v760, %v764
      %v767 = vshll.u32 %v748, 16
      %v769 = vrot.slane %v767, 1
      %v770 = vsel %vm758, %v765, %v769
      %v772 = vshrl.u32 %v739, 16
      %v774 = vshll.u32 %v739, 16
      %v776 = vrot.slane %v774, 1
      %v777 = vor.u32 %v772, %v776
      %v779 = vshll.u32 %v749, 16
      %v781 = vrot.slane %v779, 1
      %v782 = vsel %vm758, %v777, %v781
      %v784 = vshrl.u32 %v740, 16
      %v786 = vshll.u32 %v740, 16
      %v788 = vrot.slane %v786, 1
      %v789 = vor.u32 %v784, %v788
      %v791 = vshll.u32 %v750, 16
      %v793 = vrot.slane %v791, 1
      %v794 = vsel %vm758, %v789, %v793
      %v796 = vshrl.u32 %v741, 16
      %v798 = vshll.u32 %v741, 16
      %v800 = vrot.slane %v798, 1
      %v801 = vor.u32 %v796, %v800
      %v803 = vshll.u32 %v751, 16
      %v805 = vrot.slane %v803, 1
      %v806 = vsel %vm758, %v801, %v805
      %v808 = vshrl.u32 %v742, 16
      %v810 = vshll.u32 %v742, 16
      %v812 = vrot.slane %v810, 1
      %v813 = vor.u32 %v808, %v812
      %v815 = vshll.u32 %v752, 16
      %v817 = vrot.slane %v815, 1
      %v818 = vsel %vm758, %v813, %v817
      %v820 = vshrl.u32 %v743, 16
      %v822 = vshll.u32 %v743, 16
      %v824 = vrot.slane %v822, 1
      %v825 = vor.u32 %v820, %v824
      %v827 = vshll.u32 %v753, 16
      %v829 = vrot.slane %v827, 1
      %v830 = vsel %vm758, %v825, %v829
      %v832 = vshrl.u32 %v744, 16
      %v834 = vshll.u32 %v744, 16
      %v836 = vrot.slane %v834, 1
      %v837 = vor.u32 %v832, %v836
      %v839 = vshll.u32 %v754, 16
      %v841 = vrot.slane %v839, 1
      %v842 = vsel %vm758, %v837, %v841
      %v844 = vshrl.u32 %v745, 16
      %v846 = vshll.u32 %v745, 16
      %v848 = vrot.slane %v846, 1
      %v849 = vor.u32 %v844, %v848
      %v851 = vshll.u32 %v755, 16
      %v853 = vrot.slane %v851, 1
      %v854 = vsel %vm758, %v849, %v853
      %vm871 = vcmask 1046528
      %v872 = vrot.slane %v738, 1
      %v873 = vrot.slane %v748, 1
      %v874 = vsel %vm871, %v872, %v873
      %v875 = vrot.slane %v739, 1
      %v876 = vrot.slane %v749, 1
      %v877 = vsel %vm871, %v875, %v876
      %v878 = vrot.slane %v740, 1
      %v879 = vrot.slane %v750, 1
      %v880 = vsel %vm871, %v878, %v879
      %v881 = vrot.slane %v741, 1
      %v882 = vrot.slane %v751, 1
      %v883 = vsel %vm871, %v881, %v882
      %v884 = vrot.slane %v742, 1
      %v885 = vrot.slane %v752, 1
      %v886 = vsel %vm871, %v884, %v885
      %v887 = vrot.slane %v743, 1
      %v888 = vrot.slane %v753, 1
      %v889 = vsel %vm871, %v887, %v888
      %v890 = vrot.slane %v744, 1
      %v891 = vrot.slane %v754, 1
      %v892 = vsel %vm871, %v890, %v891
      %v893 = vrot.slane %v745, 1
      %v894 = vrot.slane %v755, 1
      %v895 = vsel %vm871, %v893, %v894
      %v897 = vshrl.u32 %v746, 16
      %v899 = vshll.u32 %v746, 16
      %v901 = vrot.slane %v899, 1
      %v902 = vor.u32 %v897, %v901
      %v904 = vshll.u32 %v756, 16
      %v906 = vrot.slane %v904, 1
      %v907 = vsel %vm758, %v902, %v906
      %v910 = vrot.slane %v746, 1
      %v911 = vrot.slane %v756, 1
      %v912 = vsel %vm871, %v910, %v911
      %v914 = vshrl.u32 %v747, 16
      %v916 = vshll.u32 %v747, 16
      %v918 = vrot.slane %v916, 1
      %v919 = vor.u32 %v914, %v918
      %v921 = vshll.u32 %v757, 16
      %v923 = vrot.slane %v921, 1
      %v924 = vsel %vm758, %v919, %v923
      %v927 = vrot.slane %v747, 1
      %v928 = vrot.slane %v757, 1
      %v929 = vsel %vm871, %v927, %v928
      %930 = vrot.lane.b32.xlu0 %v770, 8
      %v931 = vpop.permute.xlu0 %930
      %932 = vrot.lane.b32.xlu0 %v782, 8
      %v933 = vpop.permute.xlu0 %932
      %934 = vrot.lane.b32.xlu0 %v794, 8
      %v935 = vpop.permute.xlu0 %934
      %936 = vrot.lane.b32.xlu0 %v806, 8
      %v937 = vpop.permute.xlu0 %936
      %938 = vrot.lane.b32.xlu0 %v818, 8
      %v939 = vpop.permute.xlu0 %938
      %940 = vrot.lane.b32.xlu0 %v830, 8
      %v941 = vpop.permute.xlu0 %940
      %942 = vrot.lane.b32.xlu0 %v842, 8
      %v943 = vpop.permute.xlu0 %942
      %944 = vrot.lane.b32.xlu0 %v854, 8
      %v945 = vpop.permute.xlu0 %944
      %946 = vrot.lane.b32.xlu0 %v874, 16
      %v947 = vpop.permute.xlu0 %946
      %948 = vrot.lane.b32.xlu0 %v877, 16
      %v949 = vpop.permute.xlu0 %948
      %950 = vrot.lane.b32.xlu0 %v880, 16
      %v951 = vpop.permute.xlu0 %950
      %952 = vrot.lane.b32.xlu0 %v883, 16
      %v953 = vpop.permute.xlu0 %952
      %954 = vrot.lane.b32.xlu0 %v886, 16
      %v955 = vpop.permute.xlu0 %954
      %956 = vrot.lane.b32.xlu0 %v889, 16
      %v957 = vpop.permute.xlu0 %956
      %958 = vrot.lane.b32.xlu0 %v892, 16
      %v959 = vpop.permute.xlu0 %958
      %960 = vrot.lane.b32.xlu0 %v895, 16
      %v961 = vpop.permute.xlu0 %960
      %962 = vrot.lane.b32.xlu0 %v739, 24
      %v963 = vpop.permute.xlu0 %962
      %964 = vrot.lane.b32.xlu0 %v740, 24
      %v965 = vpop.permute.xlu0 %964
      %966 = vrot.lane.b32.xlu0 %v741, 24
      %v967 = vpop.permute.xlu0 %966
      %968 = vrot.lane.b32.xlu0 %v742, 24
      %v969 = vpop.permute.xlu0 %968
      %970 = vrot.lane.b32.xlu0 %v743, 24
      %v971 = vpop.permute.xlu0 %970
      %972 = vrot.lane.b32.xlu0 %v744, 24
      %v973 = vpop.permute.xlu0 %972
      %974 = vrot.lane.b32.xlu0 %v745, 24
      %v975 = vpop.permute.xlu0 %974
      %976 = vrot.lane.b32.xlu0 %v746, 24
      %v977 = vpop.permute.xlu0 %976
      %978 = vrot.lane.b32.xlu0 %v782, 32
      %v979 = vpop.permute.xlu0 %978
      %980 = vrot.lane.b32.xlu0 %v794, 32
      %v981 = vpop.permute.xlu0 %980
      %982 = vrot.lane.b32.xlu0 %v806, 32
      %v983 = vpop.permute.xlu0 %982
      %984 = vrot.lane.b32.xlu0 %v818, 32
      %v985 = vpop.permute.xlu0 %984
      %986 = vrot.lane.b32.xlu0 %v830, 32
      %v987 = vpop.permute.xlu0 %986
      %988 = vrot.lane.b32.xlu0 %v842, 32
      %v989 = vpop.permute.xlu0 %988
      %990 = vrot.lane.b32.xlu0 %v854, 32
      %v991 = vpop.permute.xlu0 %990
      %992 = vrot.lane.b32.xlu0 %v907, 32
      %v993 = vpop.permute.xlu0 %992
      %994 = vrot.lane.b32.xlu0 %v877, 40
      %v995 = vpop.permute.xlu0 %994
      %996 = vrot.lane.b32.xlu0 %v880, 40
      %v997 = vpop.permute.xlu0 %996
      %998 = vrot.lane.b32.xlu0 %v883, 40
      %v999 = vpop.permute.xlu0 %998
      %1000 = vrot.lane.b32.xlu0 %v886, 40
      %v1001 = vpop.permute.xlu0 %1000
      %1002 = vrot.lane.b32.xlu0 %v889, 40
      %v1003 = vpop.permute.xlu0 %1002
      %1004 = vrot.lane.b32.xlu0 %v892, 40
      %v1005 = vpop.permute.xlu0 %1004
      %1006 = vrot.lane.b32.xlu0 %v895, 40
      %v1007 = vpop.permute.xlu0 %1006
      %1008 = vrot.lane.b32.xlu0 %v912, 40
      %v1009 = vpop.permute.xlu0 %1008
      %1010 = vrot.lane.b32.xlu0 %v740, 48
      %v1011 = vpop.permute.xlu0 %1010
      %1012 = vrot.lane.b32.xlu0 %v741, 48
      %v1013 = vpop.permute.xlu0 %1012
      %1014 = vrot.lane.b32.xlu0 %v742, 48
      %v1015 = vpop.permute.xlu0 %1014
      %1016 = vrot.lane.b32.xlu0 %v743, 48
      %v1017 = vpop.permute.xlu0 %1016
      %1018 = vrot.lane.b32.xlu0 %v744, 48
      %v1019 = vpop.permute.xlu0 %1018
      %1020 = vrot.lane.b32.xlu0 %v745, 48
      %v1021 = vpop.permute.xlu0 %1020
      %1022 = vrot.lane.b32.xlu0 %v746, 48
      %v1023 = vpop.permute.xlu0 %1022
      %1024 = vrot.lane.b32.xlu0 %v747, 48
      %v1025 = vpop.permute.xlu0 %1024
      %1026 = vrot.lane.b32.xlu0 %v794, 56
      %v1027 = vpop.permute.xlu0 %1026
      %1028 = vrot.lane.b32.xlu0 %v806, 56
      %v1029 = vpop.permute.xlu0 %1028
      %1030 = vrot.lane.b32.xlu0 %v818, 56
      %v1031 = vpop.permute.xlu0 %1030
      %1032 = vrot.lane.b32.xlu0 %v830, 56
      %v1033 = vpop.permute.xlu0 %1032
      %1034 = vrot.lane.b32.xlu0 %v842, 56
      %v1035 = vpop.permute.xlu0 %1034
      %1036 = vrot.lane.b32.xlu0 %v854, 56
      %v1037 = vpop.permute.xlu0 %1036
      %1038 = vrot.lane.b32.xlu0 %v907, 56
      %v1039 = vpop.permute.xlu0 %1038
      %1040 = vrot.lane.b32.xlu0 %v924, 56
      %v1041 = vpop.permute.xlu0 %1040
      %1042 = vrot.lane.b32.xlu0 %v880, 64
      %v1043 = vpop.permute.xlu0 %1042
      %1044 = vrot.lane.b32.xlu0 %v883, 64
      %v1045 = vpop.permute.xlu0 %1044
      %1046 = vrot.lane.b32.xlu0 %v886, 64
      %v1047 = vpop.permute.xlu0 %1046
      %1048 = vrot.lane.b32.xlu0 %v889, 64
      %v1049 = vpop.permute.xlu0 %1048
      %1050 = vrot.lane.b32.xlu0 %v892, 64
      %v1051 = vpop.permute.xlu0 %1050
      %1052 = vrot.lane.b32.xlu0 %v895, 64
      %v1053 = vpop.permute.xlu0 %1052
      %1054 = vrot.lane.b32.xlu0 %v912, 64
      %v1055 = vpop.permute.xlu0 %1054
      %1056 = vrot.lane.b32.xlu0 %v929, 64
      %v1057 = vpop.permute.xlu0 %1056
      %vm1058 = vcmask 64512
      %v1060 = vsel %vm1058, %v738, %v931
      %v1062 = vsel %vm1058, %v739, %v933
      %v1064 = vsel %vm1058, %v740, %v935
      %v1066 = vsel %vm1058, %v741, %v937
      %v1068 = vsel %vm1058, %v742, %v939
      %v1070 = vsel %vm1058, %v743, %v941
      %v1072 = vsel %vm1058, %v744, %v943
      %v1074 = vsel %vm1058, %v745, %v945
      %vm1075 = vcmask 130048
      %v1077 = vsel %vm1075, %v1060, %v947
      %v1079 = vsel %vm1075, %v1062, %v949
      %v1081 = vsel %vm1075, %v1064, %v951
      %v1083 = vsel %vm1075, %v1066, %v953
      %v1085 = vsel %vm1075, %v1068, %v955
      %v1087 = vsel %vm1075, %v1070, %v957
      %v1089 = vsel %vm1075, %v1072, %v959
      %v1091 = vsel %vm1075, %v1074, %v961
      %vm1092 = vcmask 195584
      %v1094 = vsel %vm1092, %v1077, %v963
      %v1096 = vsel %vm1092, %v1079, %v965
      %v1098 = vsel %vm1092, %v1081, %v967
      %v1100 = vsel %vm1092, %v1083, %v969
      %v1102 = vsel %vm1092, %v1085, %v971
      %v1104 = vsel %vm1092, %v1087, %v973
      %v1106 = vsel %vm1092, %v1089, %v975
      %v1108 = vsel %vm1092, %v1091, %v977
      %vm1109 = vcmask 261120
      %v1111 = vsel %vm1109, %v1094, %v979
      %v1113 = vsel %vm1109, %v1096, %v981
      %v1115 = vsel %vm1109, %v1098, %v983
      %v1117 = vsel %vm1109, %v1100, %v985
      %v1119 = vsel %vm1109, %v1102, %v987
      %v1121 = vsel %vm1109, %v1104, %v989
      %v1123 = vsel %vm1109, %v1106, %v991
      %v1125 = vsel %vm1109, %v1108, %v993
      %vm1126 = vcmask 326656
      %v1128 = vsel %vm1126, %v1111, %v995
      %v1130 = vsel %vm1126, %v1113, %v997
      %v1132 = vsel %vm1126, %v1115, %v999
      %v1134 = vsel %vm1126, %v1117, %v1001
      %v1136 = vsel %vm1126, %v1119, %v1003
      %v1138 = vsel %vm1126, %v1121, %v1005
      %v1140 = vsel %vm1126, %v1123, %v1007
      %v1142 = vsel %vm1126, %v1125, %v1009
      %vm1143 = vcmask 392192
      %v1145 = vsel %vm1143, %v1128, %v1011
      %v1147 = vsel %vm1143, %v1130, %v1013
      %v1149 = vsel %vm1143, %v1132, %v1015
      %v1151 = vsel %vm1143, %v1134, %v1017
      %v1153 = vsel %vm1143, %v1136, %v1019
      %v1155 = vsel %vm1143, %v1138, %v1021
      %v1157 = vsel %vm1143, %v1140, %v1023
      %v1159 = vsel %vm1143, %v1142, %v1025
      %vm1160 = vcmask 457728
      %v1162 = vsel %vm1160, %v1145, %v1027
      %v1164 = vsel %vm1160, %v1147, %v1029
      %v1166 = vsel %vm1160, %v1149, %v1031
      %v1168 = vsel %vm1160, %v1151, %v1033
      %v1170 = vsel %vm1160, %v1153, %v1035
      %v1172 = vsel %vm1160, %v1155, %v1037
      %v1174 = vsel %vm1160, %v1157, %v1039
      %v1176 = vsel %vm1160, %v1159, %v1041
      %vm1177 = vcmask 523264
      %v1179 = vsel %vm1177, %v1162, %v1043
      %v1181 = vsel %vm1177, %v1164, %v1045
      %v1183 = vsel %vm1177, %v1166, %v1047
      %v1185 = vsel %vm1177, %v1168, %v1049
      %v1187 = vsel %vm1177, %v1170, %v1051
      %v1189 = vsel %vm1177, %v1172, %v1053
      %v1191 = vsel %vm1177, %v1174, %v1055
      %v1193 = vsel %vm1177, %v1176, %v1057
      %v1194 = vld [vmem:[%s5] sm:$0xf]
      %v1195 = vld [vmem:[%s5 + $0x4] sm:$0xf]
      %v1196 = vld [vmem:[%s5 + $0x8] sm:$0xf]
      %v1197 = vld [vmem:[%s5 + $0xc] sm:$0xf]
      %v1198 = vld [vmem:[%s5 + $0x10] sm:$0xf]
      %v1199 = vld [vmem:[%s5 + $0x14] sm:$0xf]
      %v1200 = vld [vmem:[%s5 + $0x18] sm:$0xf]
      %v1201 = vld [vmem:[%s5 + $0x1c] sm:$0xf]
      %v1202 = vld [vmem:[%s5 + $0x20] sm:$0xf]
      %v1212 = vunpack.c.l.b16 %v1194
      %v1213 = vunpack.c.l.b16 %v1195
      %v1214 = vunpack.c.l.b16 %v1196
      %v1215 = vunpack.c.l.b16 %v1197
      %v1216 = vunpack.c.l.b16 %v1198
      %v1217 = vunpack.c.l.b16 %v1199
      %v1218 = vunpack.c.l.b16 %v1200
      %v1219 = vunpack.c.l.b16 %v1201
      %v1220 = vunpack.c.l.b16 %v1202
      %v1221 = vpack.c.b16 %v1213, %v1212
      %v1222 = vpack.c.b16 %v1215, %v1214
      %v1223 = vpack.c.b16 %v1217, %v1216
      %v1224 = vpack.c.b16 %v1219, %v1218
      %v1225 = vpack.c.b16 %v1220, %v1220
      %vm1230 = vcmask 588800
      %v1231 = vsel %vm1230, %v1179, 0
      %v1233 = vsel %vm1230, %v1181, 0
      %v1235 = vsel %vm1230, %v1183, 0
      %v1237 = vsel %vm1230, %v1185, 0
      %v1239 = vsel %vm1230, %v1187, 0
      %v1241 = vsel %vm1230, %v1189, 0
      %v1243 = vsel %vm1230, %v1191, 0
      %v1245 = vsel %vm1230, %v1193, 0
      %vm1247 = vcmask 1043456
      %v1249 = vsel %vm1247, %v1225, 0
      %1251 = vmatprep.subr.bf16.mxu0 0
      %1252 = vmatpush1.bf16.msra.mxu0 0
      %1253 = vmatprep.subr.bf16.mxu0 0
      %1254 = vmatpush1.bf16.msra.mxu0 0
      %1255 = vmatprep.subr.bf16.mxu0 0
      %1256 = vmatpush1.bf16.msra.mxu0 0
      %1257 = vmatprep.subr.bf16.mxu0 0
      %1258 = vmatpush1.bf16.msra.mxu0 %v1249
      %1259 = vmatprep.subr.bf16.mxu0 0
      %1260 = vmatpush1.bf16.msra.mxu0 %v1224
      %1261 = vmatprep.subr.bf16.mxu0 0
      %1262 = vmatpush1.bf16.msra.mxu0 %v1223
      %1263 = vmatprep.subr.bf16.mxu0 0
      %1264 = vmatpush1.bf16.msra.mxu0 %v1222
      %1265 = vmatprep.subr.bf16.mxu0 0
      %1266 = vmatpush1.bf16.msra.mxu0 %v1221
      %1267 = vmatprep.subr.bf16.mxu0 0
      %1268 = vmatpush2.bf16.msra.mxu0 0
      %1269 = vmatprep.subr.bf16.mxu0 0
      %1270 = vmatpush2.bf16.msra.mxu0 0
      %1271 = vmatprep.subr.bf16.mxu0 0
      %1272 = vmatpush2.bf16.msra.mxu0 0
      %1273 = vmatprep.subr.bf16.mxu0 0
      %1274 = vmatpush2.bf16.msra.mxu0 0
      %1275 = vmatprep.subr.bf16.mxu0 0
      %1276 = vmatpush2.bf16.msra.mxu0 0
      %1277 = vmatprep.subr.bf16.mxu0 0
      %1278 = vmatpush2.bf16.msra.mxu0 0
      %1279 = vmatprep.subr.bf16.mxu0 0
      %1280 = vmatpush2.bf16.msra.mxu0 0
      %1281 = vmatprep.subr.bf16.mxu0 0
      %1282 = vmatpush2.bf16.msra.mxu0 0
      %1283 = vmatprep.mubr.bf16.mxu0 0
      %1284 = vmatmul.mubr.bf16.gmra.mxu0 %v1231
      %v1285 = vpop.f32.mrf.mxu0
      %v1286 = vadd.f32 0.0, %v1285
      %v1287 = vpop.f32.mrf.mxu0
      %v1288 = vpop.f32.mrf.mxu0
      %v1289 = vadd.f32 0.0, %v1288
      %v1290 = vpop.f32.mrf.mxu0
      %1291 = vmatprep.mubr.bf16.mxu0 0
      %1292 = vmatmul.mubr.bf16.gmra.mxu0 %v1233
      %v1293 = vpop.f32.mrf.mxu0
      %v1294 = vadd.f32 0.0, %v1293
      %v1295 = vpop.f32.mrf.mxu0
      %v1296 = vpop.f32.mrf.mxu0
      %v1297 = vadd.f32 0.0, %v1296
      %v1298 = vpop.f32.mrf.mxu0
      %1299 = vmatprep.mubr.bf16.mxu0 0
      %1300 = vmatmul.mubr.bf16.gmra.mxu0 %v1235
      %v1301 = vpop.f32.mrf.mxu0
      %v1302 = vadd.f32 0.0, %v1301
      %v1303 = vpop.f32.mrf.mxu0
      %v1304 = vpop.f32.mrf.mxu0
      %v1305 = vadd.f32 0.0, %v1304
      %v1306 = vpop.f32.mrf.mxu0
      %1307 = vmatprep.mubr.bf16.mxu0 0
      %1308 = vmatmul.mubr.bf16.gmra.mxu0 %v1237
      %v1309 = vpop.f32.mrf.mxu0
      %v1310 = vadd.f32 0.0, %v1309
      %v1311 = vpop.f32.mrf.mxu0
      %v1312 = vpop.f32.mrf.mxu0
      %v1313 = vadd.f32 0.0, %v1312
      %v1314 = vpop.f32.mrf.mxu0
      %1315 = vmatprep.mubr.bf16.mxu0 0
      %1316 = vmatmul.mubr.bf16.gmra.mxu0 %v1239
      %v1317 = vpop.f32.mrf.mxu0
      %v1318 = vadd.f32 0.0, %v1317
      %v1319 = vpop.f32.mrf.mxu0
      %v1320 = vpop.f32.mrf.mxu0
      %v1321 = vadd.f32 0.0, %v1320
      %v1322 = vpop.f32.mrf.mxu0
      %1323 = vmatprep.mubr.bf16.mxu0 0
      %1324 = vmatmul.mubr.bf16.gmra.mxu0 %v1241
      %v1325 = vpop.f32.mrf.mxu0
      %v1326 = vadd.f32 0.0, %v1325
      %v1327 = vpop.f32.mrf.mxu0
      %v1328 = vpop.f32.mrf.mxu0
      %v1329 = vadd.f32 0.0, %v1328
      %v1330 = vpop.f32.mrf.mxu0
      %1331 = vmatprep.mubr.bf16.mxu0 0
      %1332 = vmatmul.mubr.bf16.gmra.mxu0 %v1243
      %v1333 = vpop.f32.mrf.mxu0
      %v1334 = vadd.f32 0.0, %v1333
      %v1335 = vpop.f32.mrf.mxu0
      %v1336 = vpop.f32.mrf.mxu0
      %v1337 = vadd.f32 0.0, %v1336
      %v1338 = vpop.f32.mrf.mxu0
      %1339 = vmatprep.mubr.bf16.mxu0 0
      %1340 = vmatmul.mubr.bf16.gmra.mxu0 %v1245
      %v1341 = vpop.f32.mrf.mxu0
      %v1342 = vadd.f32 0.0, %v1341
      %v1343 = vpop.f32.mrf.mxu0
      %v1344 = vpop.f32.mrf.mxu0
      %v1345 = vadd.f32 0.0, %v1344
      %v1346 = vpop.f32.mrf.mxu0
      %1347 = vdwg.mxu0
      %v1348 = vpack.c.bf16 %v1289, %v1286
      %v1349 = vpack.c.bf16 %v1297, %v1294
      %v1350 = vpack.c.bf16 %v1305, %v1302
      %v1351 = vpack.c.bf16 %v1313, %v1310
      %v1352 = vpack.c.bf16 %v1321, %v1318
      %v1353 = vpack.c.bf16 %v1329, %v1326
      %v1354 = vpack.c.bf16 %v1337, %v1334
      %v1355 = vpack.c.bf16 %v1345, %v1342
      %v1364 = vunpack.c.l.b16 %v1348
      %v1365 = vunpack.c.h.b16 %v1348
      %v1366 = vunpack.c.l.b16 %v1349
      %v1367 = vunpack.c.h.b16 %v1349
      %v1368 = vunpack.c.l.b16 %v1350
      %v1369 = vunpack.c.h.b16 %v1350
      %v1370 = vunpack.c.l.b16 %v1351
      %v1371 = vunpack.c.h.b16 %v1351
      %v1372 = vunpack.c.l.b16 %v1352
      %v1373 = vunpack.c.h.b16 %v1352
      %v1374 = vunpack.c.l.b16 %v1353
      %v1375 = vunpack.c.h.b16 %v1353
      %v1376 = vunpack.c.l.b16 %v1354
      %v1377 = vunpack.c.h.b16 %v1354
      %v1378 = vunpack.c.l.b16 %v1355
      %v1379 = vunpack.c.h.b16 %v1355
      %v1380 = vpack.c.b16 %v1364, %v1364
      %v1381 = vpack.c.b16 %v1365, %v1365
      %v1382 = vpack.c.b16 %v1366, %v1366
      %v1383 = vpack.c.b16 %v1367, %v1367
      %v1384 = vpack.c.b16 %v1368, %v1368
      %v1385 = vpack.c.b16 %v1369, %v1369
      %v1386 = vpack.c.b16 %v1370, %v1370
      %v1387 = vpack.c.b16 %v1371, %v1371
      %v1388 = vpack.c.b16 %v1372, %v1372
      %v1389 = vpack.c.b16 %v1373, %v1373
      %v1390 = vpack.c.b16 %v1374, %v1374
      %v1391 = vpack.c.b16 %v1375, %v1375
      %v1392 = vpack.c.b16 %v1376, %v1376
      %v1393 = vpack.c.b16 %v1377, %v1377
      %v1394 = vpack.c.b16 %v1378, %v1378
      %v1395 = vpack.c.b16 %v1379, %v1379
      %vm1412 = vcmask 125952
      %1413 = vst.msk [vmem:[%s458] sm:$0xf] %vm1412, %v1380
      %1414 = vst.msk [vmem:[%s458 + $0x4] sm:$0xf] %vm1412, %v1381
      %1415 = vst.msk [vmem:[%s458 + $0x8] sm:$0xf] %vm1412, %v1382
      %1416 = vst.msk [vmem:[%s458 + $0xc] sm:$0xf] %vm1412, %v1383
      %1417 = vst.msk [vmem:[%s458 + $0x10] sm:$0xf] %vm1412, %v1384
      %1418 = vst.msk [vmem:[%s458 + $0x14] sm:$0xf] %vm1412, %v1385
      %1419 = vst.msk [vmem:[%s458 + $0x18] sm:$0xf] %vm1412, %v1386
      %1420 = vst.msk [vmem:[%s458 + $0x1c] sm:$0xf] %vm1412, %v1387
      %1421 = vst.msk [vmem:[%s458 + $0x20] sm:$0xf] %vm1412, %v1388
      %1422 = vst.msk [vmem:[%s458 + $0x24] sm:$0xf] %vm1412, %v1389
      %1423 = vst.msk [vmem:[%s458 + $0x28] sm:$0xf] %vm1412, %v1390
      %1424 = vst.msk [vmem:[%s458 + $0x2c] sm:$0xf] %vm1412, %v1391
      %1425 = vst.msk [vmem:[%s458 + $0x30] sm:$0xf] %vm1412, %v1392
      %1426 = vst.msk [vmem:[%s458 + $0x34] sm:$0xf] %vm1412, %v1393
      %1427 = vst.msk [vmem:[%s458 + $0x38] sm:$0xf] %vm1412, %v1394
      %1428 = vst.msk [vmem:[%s458 + $0x3c] sm:$0xf] %vm1412, %v1395
      %v1429 = vsel %vm1075, %v1286, 0.0
      %v1430 = vsel %vm1075, %v1289, 0.0
      %v1431 = vadd.f32 %v1429, %v1430
      %v1432 = vsel %vm1075, %v1294, 0.0
      %v1433 = vadd.f32 %v1431, %v1432
      %v1434 = vsel %vm1075, %v1297, 0.0
      %v1435 = vadd.f32 %v1433, %v1434
      %v1436 = vsel %vm1075, %v1302, 0.0
      %v1437 = vadd.f32 %v1435, %v1436
      %v1438 = vsel %vm1075, %v1305, 0.0
      %v1439 = vadd.f32 %v1437, %v1438
      %v1440 = vsel %vm1075, %v1310, 0.0
      %v1441 = vadd.f32 %v1439, %v1440
      %v1442 = vsel %vm1075, %v1313, 0.0
      %v1443 = vadd.f32 %v1441, %v1442
      %v1444 = vsel %vm1075, %v1318, 0.0
      %v1445 = vadd.f32 %v1443, %v1444
      %v1446 = vsel %vm1075, %v1321, 0.0
      %v1447 = vadd.f32 %v1445, %v1446
      %v1448 = vsel %vm1075, %v1326, 0.0
      %v1449 = vadd.f32 %v1447, %v1448
      %v1450 = vsel %vm1075, %v1329, 0.0
      %v1451 = vadd.f32 %v1449, %v1450
      %v1452 = vsel %vm1075, %v1334, 0.0
      %v1453 = vadd.f32 %v1451, %v1452
      %v1454 = vsel %vm1075, %v1337, 0.0
      %v1455 = vadd.f32 %v1453, %v1454
      %v1456 = vsel %vm1075, %v1342, 0.0
      %v1457 = vadd.f32 %v1455, %v1456
      %v1458 = vsel %vm1075, %v1345, 0.0
      %v1459 = vadd.f32 %v1457, %v1458
      %v1460 = vrot.slane %v1459, 4
      %v1461 = vadd.f32 %v1459, %v1460
      %v1462 = vrot.slane %v1461, 2
      %v1463 = vadd.f32 %v1461, %v1462
      %v1464 = vrot.slane %v1463, 1
      %v1465 = vadd.f32 %v1463, %v1464
      %v1466 = vmul.f32 %v1286, %v1286
      %v1467 = vmul.f32 %v1289, %v1289
      %v1468 = vmul.f32 %v1294, %v1294
      %v1469 = vmul.f32 %v1297, %v1297
      %v1470 = vmul.f32 %v1302, %v1302
      %v1471 = vmul.f32 %v1305, %v1305
      %v1472 = vmul.f32 %v1310, %v1310
      %v1473 = vmul.f32 %v1313, %v1313
      %v1474 = vmul.f32 %v1318, %v1318
      %v1475 = vmul.f32 %v1321, %v1321
      %v1476 = vmul.f32 %v1326, %v1326
      %v1477 = vmul.f32 %v1329, %v1329
      %v1478 = vmul.f32 %v1334, %v1334
      %v1479 = vmul.f32 %v1337, %v1337
      %v1480 = vmul.f32 %v1342, %v1342
      %v1481 = vmul.f32 %v1345, %v1345
      %v1482 = vsel %vm1075, %v1466, 0.0
      %v1483 = vsel %vm1075, %v1467, 0.0
      %v1484 = vadd.f32 %v1482, %v1483
      %v1485 = vsel %vm1075, %v1468, 0.0
      %v1486 = vadd.f32 %v1484, %v1485
      %v1487 = vsel %vm1075, %v1469, 0.0
      %v1488 = vadd.f32 %v1486, %v1487
      %v1489 = vsel %vm1075, %v1470, 0.0
      %v1490 = vadd.f32 %v1488, %v1489
      %v1491 = vsel %vm1075, %v1471, 0.0
      %v1492 = vadd.f32 %v1490, %v1491
      %v1493 = vsel %vm1075, %v1472, 0.0
      %v1494 = vadd.f32 %v1492, %v1493
      %v1495 = vsel %vm1075, %v1473, 0.0
      %v1496 = vadd.f32 %v1494, %v1495
      %v1497 = vsel %vm1075, %v1474, 0.0
      %v1498 = vadd.f32 %v1496, %v1497
      %v1499 = vsel %vm1075, %v1475, 0.0
      %v1500 = vadd.f32 %v1498, %v1499
      %v1501 = vsel %vm1075, %v1476, 0.0
      %v1502 = vadd.f32 %v1500, %v1501
      %v1503 = vsel %vm1075, %v1477, 0.0
      %v1504 = vadd.f32 %v1502, %v1503
      %v1505 = vsel %vm1075, %v1478, 0.0
      %v1506 = vadd.f32 %v1504, %v1505
      %v1507 = vsel %vm1075, %v1479, 0.0
      %v1508 = vadd.f32 %v1506, %v1507
      %v1509 = vsel %vm1075, %v1480, 0.0
      %v1510 = vadd.f32 %v1508, %v1509
      %v1511 = vsel %vm1075, %v1481, 0.0
      %v1512 = vadd.f32 %v1510, %v1511
      %v1513 = vrot.slane %v1512, 4
      %v1514 = vadd.f32 %v1512, %v1513
      %v1515 = vrot.slane %v1514, 2
      %v1516 = vadd.f32 %v1514, %v1515
      %v1517 = vrot.slane %v1516, 1
      %v1518 = vadd.f32 %v1516, %v1517
      %vm1519 = vcmask 1040384
      %v1520 = vsel %vm1519, %v1465, %v1518
      %vm1521 = vcmask 123904
      %1522 = vst.msk [vmem:[%s467] sm:$0x3] %vm1521, %v1520
      %s1523 = smul.u32 8, %s24
      %p1524 = scmp.lt.s32.totalorder %s23, 1
      %s1525 = scalar_select %p1524, %s23, 1
      %p1526 = scmp.lt.s32.totalorder %s1523, 15
      %s1527 = scalar_select %p1526, %s1523, 15
      %s1528 = smul.addr %s1527, 2
      %s1529 = smul.addr %s1525, 32
      %s1530 = sadd.s32 %s1528, %s1529
      %s1531 = smul.addr %s1530, 4
      %s1532 = scalar_lea.vmem %s6, %s1531
      %p1533 = scmp.lt.s32.totalorder %s23, 1
      %s1534 = scalar_select %p1533, %s23, 1
      %p1535 = scmp.lt.s32.totalorder %s24, 1
      %s1536 = scalar_select %p1535, %s24, 1
      %s1537 = smul.addr %s1534, 2
      %s1538 = sadd.s32 %s1536, %s1537
      %s1539 = smul.addr %s1538, 2
      %s1540 = scalar_lea.vmem %s7, %s1539
      // Predicated region
      $region45: #{darknet_block.4} parent=43 // pred_check
        %p1541 = pneg %p214
      $region46: #{darknet_block.4} parent=43 // pred_check_branch
        %1543 = sbr.rel (%p1541) target = $region48
      $region47: #{darknet_block.4} parent=43 // pred_region
        %s1544 = smul.u32 8, %s24
      $region48: #{darknet_block.4} parent=43 // pred_fallthru
        _
      // Predicated region
      $region49: #{darknet_block.4} parent=43 // pred_check
        %p1545 = pneg %p242
      $region50: #{darknet_block.4} parent=43 // pred_check_branch
        %1547 = sbr.rel (%p1545) target = $region52
      $region51: #{darknet_block.4} parent=43 // pred_region
        _
      $region52: #{darknet_block.4} parent=43 // pred_fallthru
        _
    $region44: #{darknet_block.4} parent=5 // pred_fallthru
      _
    %p1548 = scmp.le.s32.totalorder 2, %s14
    // Predicated region
    $region53: #{darknet_block.4} parent=5 // pred_check
      %p1549 = pneg %p1548
    $region54: #{darknet_block.4} parent=5 // pred_check_branch
      %1551 = sbr.rel (%p1549) target = $region56
    $region55: #{darknet_block.4} parent=5 // pred_region
      %s1552 = ssub.s32 %s14, 2
      // Predicated region
      $region57: #{darknet_block.4} parent=55 // pred_check
        %p1553 = pneg %p220
      $region58: #{darknet_block.4} parent=55 // pred_check_branch
        %1555 = sbr.rel (%p1553) target = $region60
      $region59: #{darknet_block.4} parent=55 // pred_region
        %s1556 = smul.u32 8, %s26
        %p1557 = scmp.lt.s32.totalorder %s25, 1
        %s1558 = scalar_select %p1557, %s25, 1
        %p1559 = scmp.lt.s32.totalorder %s1556, 15
        %s1560 = scalar_select %p1559, %s1556, 15
        %s1561 = smul.addr %s1560, 2
        %s1562 = smul.addr %s1558, 32
        %s1563 = sadd.s32 %s1561, %s1562
        %s1564 = smul.addr %s1563, 4
        %s1565 = scalar_lea.vmem %s6, %s1564
      $region60: #{darknet_block.4} parent=55 // pred_fallthru
        _
      // Predicated region
      $region61: #{darknet_block.4} parent=55 // pred_check
        %p1566 = pneg %p248
      $region62: #{darknet_block.4} parent=55 // pred_check_branch
        %1568 = sbr.rel (%p1566) target = $region64
      $region63: #{darknet_block.4} parent=55 // pred_region
        %p1569 = scmp.lt.s32.totalorder %s25, 1
        %s1570 = scalar_select %p1569, %s25, 1
        %p1571 = scmp.lt.s32.totalorder %s26, 1
        %s1572 = scalar_select %p1571, %s26, 1
        %s1573 = smul.addr %s1570, 2
        %s1574 = sadd.s32 %s1572, %s1573
        %s1575 = smul.addr %s1574, 2
        %s1576 = scalar_lea.vmem %s7, %s1575
      $region64: #{darknet_block.4} parent=55 // pred_fallthru
        _
    $region56: #{darknet_block.4} parent=5 // pred_fallthru
      _
  $region6: #{darknet_block.4} parent=0 // loop_footer
    %s18 = sadd.s32 1, %s14
  $region7: #{darknet_block.4} parent=0 // loop_footer_branch
    %13 = sbr.rel target = $region3
  $region8: #{darknet_block.4} parent=0 // loop_exit
    _

// kernel: darknet_block.5
$region0: #{darknet_block.5}
  #allocation0 [shape = 'u32[]', space=smem, size = 0x4, offset = 0x4, fixed_abs, tag = 'smem constant byte address 0x4 - core index']
  #allocation1 [shape = 'u32[144,128]{1,0:T(1,128)}', space=vmem, size = 0x12000, scoped, tag = 'internal scratch']
  %s0 = inlined_call_operand.vmem [shape: bf16[32,256], index: 0, kind: input, shape index: {}]
  %s1 = inlined_call_operand.vmem [shape: f32[32,256], index: 1, kind: input, shape index: {}]
  %s2 = inlined_call_operand.vmem [shape: f32[1,256], index: 2, kind: input, shape index: {}]
  %s3 = inlined_call_operand.vmem [shape: f32[1,256], index: 3, kind: input, shape index: {}]
  %s4 = inlined_call_operand.vmem [shape: f32[32,256], index: 4, kind: output, shape index: {}]
  %s5 = sld [smem:[#allocation0]]
  $region26: #{darknet_block.5} parent=0
    _
  %s7 = ssub.s32 1, %s5
  %s8 = scalar_select 0, %s7, %s5
  // Predicated region
  $region2: #{darknet_block.5} parent=0 // pred_check
    _
  $region3: #{darknet_block.5} parent=0 // pred_check_branch
    %10 = sbr.rel (0) target = $region5
  $region4: #{darknet_block.5} parent=0 // pred_region
    _
  $region5: #{darknet_block.5} parent=0 // pred_fallthru
    _
  // Predicated region
  $region6: #{darknet_block.5} parent=0 // pred_check
    _
  $region7: #{darknet_block.5} parent=0 // pred_check_branch
    %12 = sbr.rel (0) target = $region9
  $region8: #{darknet_block.5} parent=0 // pred_region
    _
  $region9: #{darknet_block.5} parent=0 // pred_fallthru
    _
  // Predicated region
  $region10: #{darknet_block.5} parent=0 // pred_check
    _
  $region11: #{darknet_block.5} parent=0 // pred_check_branch
    %14 = sbr.rel (0) target = $region13
  $region12: #{darknet_block.5} parent=0 // pred_region
    _
  $region13: #{darknet_block.5} parent=0 // pred_fallthru
    _
  // Predicated region
  $region14: #{darknet_block.5} parent=0 // pred_check
    _
  $region15: #{darknet_block.5} parent=0 // pred_check_branch
    %16 = sbr.rel (0) target = $region17
  $region16: #{darknet_block.5} parent=0 // pred_region
    _
  $region17: #{darknet_block.5} parent=0 // pred_fallthru
    _
  %v17 = vld [vmem:[%s0] sm:$0xff]
  %v18 = vld [vmem:[%s0 + $0x8] sm:$0xff]
  %v19 = vld [vmem:[%s0 + $0x10] sm:$0xff]
  %v20 = vld [vmem:[%s0 + $0x18] sm:$0xff]
  %v21 = vunpack.c.l.bf16 %v17
  %v22 = vunpack.c.h.bf16 %v17
  %v23 = vunpack.c.l.bf16 %v18
  %v24 = vunpack.c.h.bf16 %v18
  %v25 = vunpack.c.l.bf16 %v19
  %v26 = vunpack.c.h.bf16 %v19
  %v27 = vunpack.c.l.bf16 %v20
  %v28 = vunpack.c.h.bf16 %v20
  %v29 = vld [vmem:[%s2] sm:$0x3]
  %v31 = vlaneseq
  %v32 = vshrl.u32 %v31, 7
  %v33 = vsub.s32 0, %v32
  %v34 = vrot.slane %v29, %v33
  %v35 = vlaneseq
  %v36 = vshrl.u32 %v35, 7
  %v37 = vsub.s32 1, %v36
  %v38 = vrot.slane %v29, %v37
  %v41 = vmul.f32 %v21, %v34
  %v42 = vmul.f32 %v22, %v38
  %v43 = vmul.f32 %v23, %v34
  %v44 = vmul.f32 %v24, %v38
  %v45 = vmul.f32 %v25, %v34
  %v46 = vmul.f32 %v26, %v38
  %v47 = vmul.f32 %v27, %v34
  %v48 = vmul.f32 %v28, %v38
  %v49 = vld [vmem:[%s3] sm:$0x3]
  %v51 = vlaneseq
  %v52 = vshrl.u32 %v51, 7
  %v53 = vsub.s32 0, %v52
  %v54 = vrot.slane %v49, %v53
  %v55 = vlaneseq
  %v56 = vshrl.u32 %v55, 7
  %v57 = vsub.s32 1, %v56
  %v58 = vrot.slane %v49, %v57
  %v61 = vadd.f32 %v41, %v54
  %v62 = vadd.f32 %v42, %v58
  %v63 = vadd.f32 %v43, %v54
  %v64 = vadd.f32 %v44, %v58
  %v65 = vadd.f32 %v45, %v54
  %v66 = vadd.f32 %v46, %v58
  %v67 = vadd.f32 %v47, %v54
  %v68 = vadd.f32 %v48, %v58
  %vm69 = vcmp.gt.f32.partialorder %v61, 0.0
  %vm70 = vcmp.gt.f32.partialorder %v62, 0.0
  %vm71 = vcmp.gt.f32.partialorder %v63, 0.0
  %vm72 = vcmp.gt.f32.partialorder %v64, 0.0
  %vm73 = vcmp.gt.f32.partialorder %v65, 0.0
  %vm74 = vcmp.gt.f32.partialorder %v66, 0.0
  %vm75 = vcmp.gt.f32.partialorder %v67, 0.0
  %vm76 = vcmp.gt.f32.partialorder %v68, 0.0
  %v77 = vmul.f32 %v61, 0.1
  %v78 = vmul.f32 %v62, 0.1
  %v79 = vmul.f32 %v63, 0.1
  %v80 = vmul.f32 %v64, 0.1
  %v81 = vmul.f32 %v65, 0.1
  %v82 = vmul.f32 %v66, 0.1
  %v83 = vmul.f32 %v67, 0.1
  %v84 = vmul.f32 %v68, 0.1
  %v85 = vsel %vm69, %v61, %v77
  %v86 = vsel %vm70, %v62, %v78
  %v87 = vsel %vm71, %v63, %v79
  %v88 = vsel %vm72, %v64, %v80
  %v89 = vsel %vm73, %v65, %v81
  %v90 = vsel %vm74, %v66, %v82
  %v91 = vsel %vm75, %v67, %v83
  %v92 = vsel %vm76, %v68, %v84
  %v93 = vld [vmem:[%s1] sm:$0xff]
  %v94 = vld [vmem:[%s1 + $0x8] sm:$0xff]
  %v95 = vld [vmem:[%s1 + $0x10] sm:$0xff]
  %v96 = vld [vmem:[%s1 + $0x18] sm:$0xff]
  %v97 = vld [vmem:[%s1 + $0x20] sm:$0xff]
  %v98 = vld [vmem:[%s1 + $0x28] sm:$0xff]
  %v99 = vld [vmem:[%s1 + $0x30] sm:$0xff]
  %v100 = vld [vmem:[%s1 + $0x38] sm:$0xff]
  %v101 = vadd.f32 %v85, %v93
  %v102 = vadd.f32 %v86, %v94
  %v103 = vadd.f32 %v87, %v95
  %v104 = vadd.f32 %v88, %v96
  %v105 = vadd.f32 %v89, %v97
  %v106 = vadd.f32 %v90, %v98
  %v107 = vadd.f32 %v91, %v99
  %v108 = vadd.f32 %v92, %v100
  %109 = vst [vmem:[%s4] sm:$0xff] %v101
  %110 = vst [vmem:[%s4 + $0x8] sm:$0xff] %v102
  %111 = vst [vmem:[%s4 + $0x10] sm:$0xff] %v103
  %112 = vst [vmem:[%s4 + $0x18] sm:$0xff] %v104
  %113 = vst [vmem:[%s4 + $0x20] sm:$0xff] %v105
  %114 = vst [vmem:[%s4 + $0x28] sm:$0xff] %v106
  %115 = vst [vmem:[%s4 + $0x30] sm:$0xff] %v107
  %116 = vst [vmem:[%s4 + $0x38] sm:$0xff] %v108
  // Predicated region
  $region18: #{darknet_block.5} parent=0 // pred_check
    _
  $region19: #{darknet_block.5} parent=0 // pred_check_branch
    %118 = sbr.rel (0) target = $region21
  $region20: #{darknet_block.5} parent=0 // pred_region
    _
  $region21: #{darknet_block.5} parent=0 // pred_fallthru
    _
  // Predicated region
  $region22: #{darknet_block.5} parent=0 // pred_check
    _
  $region23: #{darknet_block.5} parent=0 // pred_check_branch
    %120 = sbr.rel (0) target = $region25
  $region24: #{darknet_block.5} parent=0 // pred_region
    _
  $region25: #{darknet_block.5} parent=0 // pred_fallthru
    _

</llo_original>
